<compile_context>
chip_gen: v5e
topology: v5e:2x2
jax: 0.10.0
libtpu: 0.0.40
codegen_flags: <defaults>
</compile_context>

<pallas_src>
import math
import functools

import jax
import jax.numpy as jnp
import numpy as np
from jax.experimental import pallas as pl
from jax.experimental.pallas import tpu as pltpu


def _round_up(x, m):
    return ((x + m - 1) // m) * m


# ----------------------------------------------------------------------------
# Fused kernel: the whole layer stack applied to one (C, tile_t) tile.
# Channels live on sublanes, time on lanes.
# ----------------------------------------------------------------------------
def _cortex_kernel(x_ref, w_ref, bp_ref, asc_ref, bsc_ref, o_ref, *,
                   layer_dims, c_pad, c_last, compute_dtype):
    x0 = x_ref[...].astype(jnp.float32)                  # (c_in0, tile_t)
    c_in0, tile_t = x0.shape
    if c_pad > c_in0:                                    # pad carry channels to c_pad
        x = jnp.concatenate(
            [x0, jnp.zeros((c_pad - c_in0, tile_t), jnp.float32)], axis=0)
    else:
        x = x0

    for l, (c_in, c_out, reps) in enumerate(layer_dims):
        # main path (MXU): relu(W_l^T @ x + b_l).  The channel shuffle and the
        # main BN scale are folded into W_l at pack time, so only a bias add
        # and the ReLU remain on the VPU.  Padded rows of W_l are zero.
        conv = jnp.dot(w_ref[l], x.astype(compute_dtype),
                       preferred_element_type=jnp.float32)   # (c_pad, tile_t)
        main = jnp.maximum(conv + bp_ref[l], 0.0)

        # shortcut path: channel tiling along sublanes via static slices/concat
        # (no iota, no masks, no matmul), then the shortcut-BN FMA.  asc/bsc are
        # zero past c_out, so padded carry rows stay exactly zero.
        if reps == 1:
            sc = x
        else:
            tiled = jnp.concatenate([x[:c_in]] * reps, axis=0)   # (reps*c_in, t)
            if reps * c_in >= c_pad:
                sc = tiled[:c_pad]
            else:
                sc = jnp.concatenate(
                    [tiled,
                     jnp.zeros((c_pad - reps * c_in, tile_t), jnp.float32)],
                    axis=0)

        # TODO(synk): on v7x a bf16 carry here would shrink live f32 temps and
        # allow bigger time tiles; kept f32 for v5e (no bf16 VPU) and accuracy.
        x = main + sc * asc_ref[l] + bsc_ref[l]

    o_ref[...] = x[:c_last, :].astype(o_ref.dtype)


# ----------------------------------------------------------------------------
# Raw (PyTorch-equivalent) per-layer parameters.
# ----------------------------------------------------------------------------
def make_layer_raw_params(key, in_features, out_features, groups):
    cig = in_features // groups
    ks = jax.random.split(key, 9)
    w = jax.random.normal(ks[0], (out_features, cig), jnp.float32) / math.sqrt(cig)
    gamma = 1.0 + 0.1 * jax.random.normal(ks[1], (out_features,), jnp.float32)
    beta = 0.1 * jax.random.normal(ks[2], (out_features,), jnp.float32)
    mean = 0.1 * jax.random.normal(ks[3], (out_features,), jnp.float32)
    var = 1.0 + 0.1 * jnp.abs(jax.random.normal(ks[4], (out_features,), jnp.float32))
    gamma_s = 1.0 + 0.1 * jax.random.normal(ks[5], (out_features,), jnp.float32)
    beta_s = 0.1 * jax.random.normal(ks[6], (out_features,), jnp.float32)
    mean_s = 0.1 * jax.random.normal(ks[7], (out_features,), jnp.float32)
    var_s = 1.0 + 0.1 * jnp.abs(jax.random.normal(ks[8], (out_features,), jnp.float32))
    return dict(w=w, gamma=gamma, beta=beta, mean=mean, var=var,
                gamma_s=gamma_s, beta_s=beta_s, mean_s=mean_s, var_s=var_s,
                in_features=in_features, out_features=out_features, groups=groups)


# ----------------------------------------------------------------------------
# Fold + pad parameters for the fused kernel (channels-on-sublane layout).
#   W[l]   : (c_pad, c_pad) transposed block-diag conv weight, shuffle perm and
#            main-BN scale folded into the rows
#   Bp[l]  : (c_pad, 1) shuffled main-BN shift
#   Asc/Bsc: (c_pad, 1) shortcut-BN scale/shift (zero past c_out)
# ----------------------------------------------------------------------------
def pack_cortex_params(raw_params, *, compute_dtype=jnp.bfloat16, eps=1e-5):
    groups = raw_params[0]["groups"]
    c_max = max([raw_params[0]["in_features"]] +
                [p["out_features"] for p in raw_params])
    c_pad = _round_up(c_max, 8)          # sublane granularity only (not 128!)

    Ws, Bps, Ascs, Bscs, dims = [], [], [], [], []
    for p in raw_params:
        c_in, c_out = p["in_features"], p["out_features"]
        cig, cog = c_in // groups, c_out // groups

        # Conv1d(in, out, 1, groups, bias=False) as block-diagonal (c_in, c_out).
        w_np = np.asarray(p["w"], np.float32)
        w_bd = np.zeros((c_in, c_out), np.float32)
        for g in range(groups):
            w_bd[g * cig:(g + 1) * cig, g * cog:(g + 1) * cog] = \
                w_np[g * cog:(g + 1) * cog, :].T

        # main BN (eval): y = conv * a + b ; shuffle permutation on outputs.
        a = np.asarray(p["gamma"]) / np.sqrt(np.asarray(p["var"]) + eps)
        bvec = np.asarray(p["beta"]) - np.asarray(p["mean"]) * a
        perm = np.arange(c_out).reshape(groups, cog).T.reshape(-1)
        w_fold = w_bd[:, perm] * a[perm][None, :]          # (c_in, c_out)
        b_fold = bvec[perm]

        # shortcut BN (no act)
        a_s = np.asarray(p["gamma_s"]) / np.sqrt(np.asarray(p["var_s"]) + eps)
        b_s = np.asarray(p["beta_s"]) - np.asarray(p["mean_s"]) * a_s

        Wt = np.zeros((c_pad, c_pad), np.float32)
        Wt[:c_out, :c_in] = w_fold.T                       # transposed layout
        Bp = np.zeros((c_pad, 1), np.float32);  Bp[:c_out, 0] = b_fold
        Asc = np.zeros((c_pad, 1), np.float32); Asc[:c_out, 0] = a_s
        Bsc = np.zeros((c_pad, 1), np.float32); Bsc[:c_out, 0] = b_s
        Ws.append(Wt); Bps.append(Bp); Ascs.append(Asc); Bscs.append(Bsc)
        dims.append((c_in, c_out, -(-c_out // c_in)))      # (c_in, c_out, reps)

    return dict(
        W=jnp.asarray(np.stack(Ws)).astype(compute_dtype),   # (L, c_pad, c_pad)
        Bp=jnp.asarray(np.stack(Bps)),                        # (L, c_pad, 1) f32
        Asc=jnp.asarray(np.stack(Ascs)),
        Bsc=jnp.asarray(np.stack(Bscs)),
        dims=tuple(dims), c_pad=c_pad, compute_dtype=compute_dtype)


def _tpu_vmem_limit():
    # Generation-aware budget: ~75% of physical VMEM (v5e/v6e 128 MiB -> 96 MiB,
    # v7x 64 MiB -> 48 MiB).  Falls back to the v7x-safe value.
    try:
        cap = int(pltpu.get_tpu_info().vmem_capacity_bytes)
    except Exception:
        cap = 64 * 2 ** 20
    return max(16 * 2 ** 20, int(0.75 * cap))


# ----------------------------------------------------------------------------
# Wrapper: (B, C_in, T) -> (B, C_last, T), one fused pallas_call, no transposes.
# ----------------------------------------------------------------------------
def cortex_forward_pallas(x_nct, packed, *, tile_t=None, out_dtype=None):
    W, Bp, Asc, Bsc = packed["W"], packed["Bp"], packed["Asc"], packed["Bsc"]
    dims, c_pad = packed["dims"], packed["c_pad"]
    compute_dtype = packed["compute_dtype"]
    if out_dtype is None:
        out_dtype = compute_dtype

    b, c, t = x_nct.shape
    assert c == dims[0][0], "input channels must match first layer's in_features"
    c_last = dims[-1][1]
    n_layers = len(dims)

    vmem_limit = _tpu_vmem_limit()
    in_b = jnp.dtype(x_nct.dtype).itemsize
    out_b = jnp.dtype(out_dtype).itemsize
    w_b = jnp.dtype(compute_dtype).itemsize
    # Worst-case (double-buffered) param residency in case Buffered(1) is rejected.
    param_bytes = 2 * n_layers * (c_pad * c_pad * w_b + 3 * c_pad * 4)

    def vmem_est(tt):
        return (2 * c * tt * in_b            # input tile, double buffered
                + 2 * c_last * tt * out_b    # output tile, double buffered
                + 6 * c_pad * tt * 4         # live f32 temps of the unrolled body
                + param_bytes)

    if tile_t is None:
        # Target >= ~512 KiB per stream per grid step (amortize the ~0.35 us
        # fixed per-step cost), capped by the generation's VMEM budget.
        target = (512 * 1024) // max(1, 4 * max(c, c_last))
        tile_t = min(8192, max(512, _round_up(target, 128)))
        while tile_t > 256 and vmem_est(tile_t) > vmem_limit:
            tile_t //= 2
    tile_t = _round_up(int(tile_t), 128)

    # Avoid wrapper-side copies whenever T already fits / divides the tile.
    if t <= tile_t:
        tile_t_eff, t_pad, x_in = t, t, x_nct          # full-T block, no padding
    elif t % tile_t == 0:
        tile_t_eff, t_pad, x_in = tile_t, t, x_nct
    else:
        tile_t_eff = tile_t
        t_pad = _round_up(t, tile_t)
        x_in = jnp.pad(x_nct, ((0, 0), (0, 0), (0, t_pad - t)))

    grid = (b, t_pad // tile_t_eff)
    kernel = functools.partial(_cortex_kernel, layer_dims=dims, c_pad=c_pad,
                               c_last=c_last, compute_dtype=compute_dtype)

    def run(param_mode):
        def pspec(shape):
            if param_mode is None:
                return pl.BlockSpec(shape, lambda bi, ti: (0,) * len(shape))
            return pl.BlockSpec(shape, lambda bi, ti: (0,) * len(shape),
                                pipeline_mode=param_mode)

        return pl.pallas_call(
            kernel,
            out_shape=jax.ShapeDtypeStruct((b, c_last, t_pad), out_dtype),
            grid_spec=pltpu.PrefetchScalarGridSpec(
                num_scalar_prefetch=0,
                grid=grid,
                in_specs=[
                    pl.BlockSpec((None, c, tile_t_eff),
                                 lambda bi, ti: (bi, 0, ti)),      # activations
                    pspec(W.shape),                                 # resident params
                    pspec(Bp.shape),
                    pspec(Asc.shape),
                    pspec(Bsc.shape),
                ],
                out_specs=pl.BlockSpec((None, c_last, tile_t_eff),
                                       lambda bi, ti: (bi, 0, ti)),
            ),
            compiler_params=pltpu.CompilerParams(
                dimension_semantics=("parallel", "parallel"),
                vmem_limit_bytes=vmem_limit,
            ),
        )(x_in, W, Bp, Asc, Bsc)

    try:
        # Grid-invariant params: single buffering halves their VMEM residency.
        out = run(pl.Buffered(1))
    except Exception:
        out = run(None)

    if t_pad != t:
        out = out[:, :, :t]
    return out


# ----------------------------------------------------------------------------
# Pure-JAX reference following the PyTorch op ordering exactly (eval mode).
# ----------------------------------------------------------------------------
def cortex_forward_ref(x_nct, raw_params, groups, eps=1e-5):
    x = x_nct
    for p in raw_params:
        bsz, c_in, t = x.shape
        c_out = p["w"].shape[0]
        cig, cog = c_in // groups, c_out // groups
        xg = x.reshape(bsz, groups, cig, t)
        wg = p["w"].reshape(groups, cog, cig)
        conv = jnp.einsum("bgit,goi->bgot", xg, wg,
                          precision=jax.lax.Precision.HIGHEST).reshape(bsz, c_out, t)
        a = p["gamma"] / jnp.sqrt(p["var"] + eps)
        bb = p["beta"] - p["mean"] * a
        y = jnp.maximum(conv * a[None, :, None] + bb[None, :, None], 0.0)
        if groups > 1:
            y = jnp.transpose(y.reshape(bsz, groups, cog, t),
                              (0, 2, 1, 3)).reshape(bsz, c_out, t)
        sc = x
        if c_in != c_out:
            reps = -(-c_out // c_in)
            sc = jnp.tile(sc, (1, reps, 1))[:, :c_out]
        a_s = p["gamma_s"] / jnp.sqrt(p["var_s"] + eps)
        b_s = p["beta_s"] - p["mean_s"] * a_s
        sc = sc * a_s[None, :, None] + b_s[None, :, None]
        x = y + sc
    return x


if __name__ == "__main__":
    GROUPS = 2
    # Two small configs, (B, C_in, T, features):
    #  - channel growth with reps=2 plus an identity-width layer
    #  - reps=3 tiling, non-power-of-two widths, and a channel-shrinking layer
    configs = [
        (2, 8, 200, (16, 32, 32)),
        (2, 8, 200, (24, 48, 32)),
    ]

    key = jax.random.PRNGKey(0)
    for (B, C_IN, T, FEATURES) in configs:
        key, kx, kp = jax.random.split(key, 3)
        x = jax.random.normal(kx, (B, C_IN, T), jnp.float32)

        raw, prev = [], C_IN
        for i, nf in enumerate(FEATURES):
            raw.append(make_layer_raw_params(jax.random.fold_in(kp, i), prev, nf, GROUPS))
            prev = nf

        ref = cortex_forward_ref(x, raw, GROUPS)

        # Strict gate: f32 weights / f32 output.
        packed_f32 = pack_cortex_params(raw, compute_dtype=jnp.float32)
        out_f32 = jax.block_until_ready(cortex_forward_pallas(x, packed_f32))
        assert out_f32.shape == (B, FEATURES[-1], T), out_f32.shape
        err_f32 = float(jnp.max(jnp.abs(out_f32.astype(jnp.float32) - ref)))
        assert err_f32 < 1e-2, f"f32 max abs err {err_f32}"

        # Fast path: bf16 weights, bf16 lane-trimmed output (looser tolerance).
        packed_bf16 = pack_cortex_params(raw, compute_dtype=jnp.bfloat16)
        out_bf16 = jax.block_until_ready(cortex_forward_pallas(x, packed_bf16))
        assert out_bf16.shape == (B, FEATURES[-1], T), out_bf16.shape
        assert jnp.allclose(out_bf16.astype(jnp.float32), ref, atol=3e-1, rtol=1e-1), \
            f"bf16 max abs err {float(jnp.max(jnp.abs(out_bf16.astype(jnp.float32) - ref)))}"

    print("KERNEL_OK")
</pallas_src>

<mosaic_0001>
module attributes {stable_mosaic.version = 11 : i64} {
  func.func @_cortex_kernel(%arg0: i32, %arg1: i32, %arg2: memref<1x8x200xf32, #tpu.memory_space<vmem>>, %arg3: memref<3x32x32xf32, #tpu.memory_space<vmem>>, %arg4: memref<3x32x1xf32, #tpu.memory_space<vmem>>, %arg5: memref<3x32x1xf32, #tpu.memory_space<vmem>>, %arg6: memref<3x32x1xf32, #tpu.memory_space<vmem>>, %arg7: memref<1x32x200xf32, #tpu.memory_space<vmem>>) attributes {dimension_semantics = [#tpu.dimension_semantics<parallel>, #tpu.dimension_semantics<parallel>], iteration_bounds = array<i64: 2, 1>, scalar_prefetch = 0 : i64, scratch_operands = 0 : i64, tpu.core_type = #tpu.core_type<tc>, window_params = [{transform_indices = @transform_0, window_bounds = array<i64: 1, 8, 200>}, {pipeline_mode = #tpu.pipeline_mode<synchronous>, transform_indices = @transform_1, window_bounds = array<i64: 3, 32, 32>}, {pipeline_mode = #tpu.pipeline_mode<synchronous>, transform_indices = @transform_2, window_bounds = array<i64: 3, 32, 1>}, {pipeline_mode = #tpu.pipeline_mode<synchronous>, transform_indices = @transform_3, window_bounds = array<i64: 3, 32, 1>}, {pipeline_mode = #tpu.pipeline_mode<synchronous>, transform_indices = @transform_4, window_bounds = array<i64: 3, 32, 1>}, {transform_indices = @transform_5, window_bounds = array<i64: 1, 32, 200>}]} {
    %c0 = arith.constant 0 : index
    %c0_0 = arith.constant 0 : index
    %c0_1 = arith.constant 0 : index
    %0 = vector.load %arg2[%c0, %c0_0, %c0_1] : memref<1x8x200xf32, #tpu.memory_space<vmem>>, vector<1x8x200xf32>
    %1 = vector.shape_cast %0 : vector<1x8x200xf32> to vector<8x200xf32>
    %cst = arith.constant 0.000000e+00 : f32
    %2 = vector.broadcast %cst : f32 to vector<24x200xf32>
    %3 = tpu.concatenate %1, %2 in 0 : vector<8x200xf32>, vector<24x200xf32> -> vector<32x200xf32>
    %c0_2 = arith.constant 0 : index
    %c0_3 = arith.constant 0 : index
    %c0_4 = arith.constant 0 : index
    %4 = vector.load %arg3[%c0_2, %c0_3, %c0_4] : memref<3x32x32xf32, #tpu.memory_space<vmem>>, vector<1x32x32xf32>
    %5 = vector.shape_cast %4 : vector<1x32x32xf32> to vector<32x32xf32>
    %cst_5 = arith.constant dense<0.000000e+00> : vector<32x200xf32>
    %6 = tpu.matmul %5, %3, %cst_5 {dimension_numbers = #tpu.dot_dimension_numbers<[1], [0], [0], [1], [0, 0, 1, 1], [], []>} : vector<32x32xf32>, vector<32x200xf32>, vector<32x200xf32> -> vector<32x200xf32>
    %c0_6 = arith.constant 0 : index
    %c0_7 = arith.constant 0 : index
    %c0_8 = arith.constant 0 : index
    %7 = vector.load %arg4[%c0_6, %c0_7, %c0_8] : memref<3x32x1xf32, #tpu.memory_space<vmem>>, vector<1x32x1xf32>
    %8 = vector.shape_cast %7 : vector<1x32x1xf32> to vector<32x1xf32>
    %9 = vector.broadcast %8 : vector<32x1xf32> to vector<32x200xf32>
    %10 = arith.addf %6, %9 : vector<32x200xf32>
    %cst_9 = arith.constant 0.000000e+00 : f32
    %11 = vector.broadcast %cst_9 : f32 to vector<32x200xf32>
    %12 = arith.maximumf %10, %11 : vector<32x200xf32>
    %13 = vector.extract_strided_slice %3 {offsets = [0, 0], sizes = [8, 200], strides = [1, 1]} : vector<32x200xf32> to vector<8x200xf32>
    %14 = tpu.concatenate %13, %13 in 0 : vector<8x200xf32>, vector<8x200xf32> -> vector<16x200xf32>
    %cst_10 = arith.constant 0.000000e+00 : f32
    %15 = vector.broadcast %cst_10 : f32 to vector<16x200xf32>
    %16 = tpu.concatenate %14, %15 in 0 : vector<16x200xf32>, vector<16x200xf32> -> vector<32x200xf32>
    %c0_11 = arith.constant 0 : index
    %c0_12 = arith.constant 0 : index
    %c0_13 = arith.constant 0 : index
    %17 = vector.load %arg5[%c0_11, %c0_12, %c0_13] : memref<3x32x1xf32, #tpu.memory_space<vmem>>, vector<1x32x1xf32>
    %18 = vector.shape_cast %17 : vector<1x32x1xf32> to vector<32x1xf32>
    %19 = vector.broadcast %18 : vector<32x1xf32> to vector<32x200xf32>
    %20 = arith.mulf %16, %19 : vector<32x200xf32>
    %21 = arith.addf %12, %20 : vector<32x200xf32>
    %c0_14 = arith.constant 0 : index
    %c0_15 = arith.constant 0 : index
    %c0_16 = arith.constant 0 : index
    %22 = vector.load %arg6[%c0_14, %c0_15, %c0_16] : memref<3x32x1xf32, #tpu.memory_space<vmem>>, vector<1x32x1xf32>
    %23 = vector.shape_cast %22 : vector<1x32x1xf32> to vector<32x1xf32>
    %24 = vector.broadcast %23 : vector<32x1xf32> to vector<32x200xf32>
    %25 = arith.addf %21, %24 : vector<32x200xf32>
    %c1 = arith.constant 1 : index
    %c0_17 = arith.constant 0 : index
    %c0_18 = arith.constant 0 : index
    %26 = vector.load %arg3[%c1, %c0_17, %c0_18] : memref<3x32x32xf32, #tpu.memory_space<vmem>>, vector<1x32x32xf32>
    %27 = vector.shape_cast %26 : vector<1x32x32xf32> to vector<32x32xf32>
    %cst_19 = arith.constant dense<0.000000e+00> : vector<32x200xf32>
    %28 = tpu.matmul %27, %25, %cst_19 {dimension_numbers = #tpu.dot_dimension_numbers<[1], [0], [0], [1], [0, 0, 1, 1], [], []>} : vector<32x32xf32>, vector<32x200xf32>, vector<32x200xf32> -> vector<32x200xf32>
    %c1_20 = arith.constant 1 : index
    %c0_21 = arith.constant 0 : index
    %c0_22 = arith.constant 0 : index
    %29 = vector.load %arg4[%c1_20, %c0_21, %c0_22] : memref<3x32x1xf32, #tpu.memory_space<vmem>>, vector<1x32x1xf32>
    %30 = vector.shape_cast %29 : vector<1x32x1xf32> to vector<32x1xf32>
    %31 = vector.broadcast %30 : vector<32x1xf32> to vector<32x200xf32>
    %32 = arith.addf %28, %31 : vector<32x200xf32>
    %cst_23 = arith.constant 0.000000e+00 : f32
    %33 = vector.broadcast %cst_23 : f32 to vector<32x200xf32>
    %34 = arith.maximumf %32, %33 : vector<32x200xf32>
    %35 = vector.extract_strided_slice %25 {offsets = [0, 0], sizes = [16, 200], strides = [1, 1]} : vector<32x200xf32> to vector<16x200xf32>
    %36 = tpu.concatenate %35, %35 in 0 : vector<16x200xf32>, vector<16x200xf32> -> vector<32x200xf32>
    %c1_24 = arith.constant 1 : index
    %c0_25 = arith.constant 0 : index
    %c0_26 = arith.constant 0 : index
    %37 = vector.load %arg5[%c1_24, %c0_25, %c0_26] : memref<3x32x1xf32, #tpu.memory_space<vmem>>, vector<1x32x1xf32>
    %38 = vector.shape_cast %37 : vector<1x32x1xf32> to vector<32x1xf32>
    %39 = vector.broadcast %38 : vector<32x1xf32> to vector<32x200xf32>
    %40 = arith.mulf %36, %39 : vector<32x200xf32>
    %41 = arith.addf %34, %40 : vector<32x200xf32>
    %c1_27 = arith.constant 1 : index
    %c0_28 = arith.constant 0 : index
    %c0_29 = arith.constant 0 : index
    %42 = vector.load %arg6[%c1_27, %c0_28, %c0_29] : memref<3x32x1xf32, #tpu.memory_space<vmem>>, vector<1x32x1xf32>
    %43 = vector.shape_cast %42 : vector<1x32x1xf32> to vector<32x1xf32>
    %44 = vector.broadcast %43 : vector<32x1xf32> to vector<32x200xf32>
    %45 = arith.addf %41, %44 : vector<32x200xf32>
    %c2 = arith.constant 2 : index
    %c0_30 = arith.constant 0 : index
    %c0_31 = arith.constant 0 : index
    %46 = vector.load %arg3[%c2, %c0_30, %c0_31] : memref<3x32x32xf32, #tpu.memory_space<vmem>>, vector<1x32x32xf32>
    %47 = vector.shape_cast %46 : vector<1x32x32xf32> to vector<32x32xf32>
    %cst_32 = arith.constant dense<0.000000e+00> : vector<32x200xf32>
    %48 = tpu.matmul %47, %45, %cst_32 {dimension_numbers = #tpu.dot_dimension_numbers<[1], [0], [0], [1], [0, 0, 1, 1], [], []>} : vector<32x32xf32>, vector<32x200xf32>, vector<32x200xf32> -> vector<32x200xf32>
    %c2_33 = arith.constant 2 : index
    %c0_34 = arith.constant 0 : index
    %c0_35 = arith.constant 0 : index
    %49 = vector.load %arg4[%c2_33, %c0_34, %c0_35] : memref<3x32x1xf32, #tpu.memory_space<vmem>>, vector<1x32x1xf32>
    %50 = vector.shape_cast %49 : vector<1x32x1xf32> to vector<32x1xf32>
    %51 = vector.broadcast %50 : vector<32x1xf32> to vector<32x200xf32>
    %52 = arith.addf %48, %51 : vector<32x200xf32>
    %cst_36 = arith.constant 0.000000e+00 : f32
    %53 = vector.broadcast %cst_36 : f32 to vector<32x200xf32>
    %54 = arith.maximumf %52, %53 : vector<32x200xf32>
    %c2_37 = arith.constant 2 : index
    %c0_38 = arith.constant 0 : index
    %c0_39 = arith.constant 0 : index
    %55 = vector.load %arg5[%c2_37, %c0_38, %c0_39] : memref<3x32x1xf32, #tpu.memory_space<vmem>>, vector<1x32x1xf32>
    %56 = vector.shape_cast %55 : vector<1x32x1xf32> to vector<32x1xf32>
    %57 = vector.broadcast %56 : vector<32x1xf32> to vector<32x200xf32>
    %58 = arith.mulf %45, %57 : vector<32x200xf32>
    %59 = arith.addf %54, %58 : vector<32x200xf32>
    %c2_40 = arith.constant 2 : index
    %c0_41 = arith.constant 0 : index
    %c0_42 = arith.constant 0 : index
    %60 = vector.load %arg6[%c2_40, %c0_41, %c0_42] : memref<3x32x1xf32, #tpu.memory_space<vmem>>, vector<1x32x1xf32>
    %61 = vector.shape_cast %60 : vector<1x32x1xf32> to vector<32x1xf32>
    %62 = vector.broadcast %61 : vector<32x1xf32> to vector<32x200xf32>
    %63 = arith.addf %59, %62 : vector<32x200xf32>
    %c0_43 = arith.constant 0 : index
    %c0_44 = arith.constant 0 : index
    %c0_45 = arith.constant 0 : index
    %64 = vector.load %arg7[%c0_43, %c0_44, %c0_45] : memref<1x32x200xf32, #tpu.memory_space<vmem>>, vector<1x32x200xf32>
    %65 = vector.shape_cast %64 : vector<1x32x200xf32> to vector<32x200xf32>
    %66 = vector.shape_cast %63 : vector<32x200xf32> to vector<1x32x200xf32>
    tpu.vector_store %arg7[%c0_43, %c0_44, %c0_45], %66 {strides = array<i32>} : memref<1x32x200xf32, #tpu.memory_space<vmem>>, vector<1x32x200xf32>,
    return
  }
  func.func @transform_0(%arg0: i32, %arg1: i32) -> (i32, i32, i32) {
    %c0_i32 = arith.constant 0 : i32
    %c0_i32_0 = arith.constant 0 : i32
    return %arg0, %c0_i32, %arg1 : i32, i32, i32
  }
  func.func @transform_1(%arg0: i32, %arg1: i32) -> (i32, i32, i32) {
    %c0_i32 = arith.constant 0 : i32
    %c0_i32_0 = arith.constant 0 : i32
    %c0_i32_1 = arith.constant 0 : i32
    %c0_i32_2 = arith.constant 0 : i32
    return %c0_i32, %c0_i32_0, %c0_i32_1 : i32, i32, i32
  }
  func.func @transform_2(%arg0: i32, %arg1: i32) -> (i32, i32, i32) {
    %c0_i32 = arith.constant 0 : i32
    %c0_i32_0 = arith.constant 0 : i32
    %c0_i32_1 = arith.constant 0 : i32
    %c0_i32_2 = arith.constant 0 : i32
    return %c0_i32, %c0_i32_0, %c0_i32_1 : i32, i32, i32
  }
  func.func @transform_3(%arg0: i32, %arg1: i32) -> (i32, i32, i32) {
    %c0_i32 = arith.constant 0 : i32
    %c0_i32_0 = arith.constant 0 : i32
    %c0_i32_1 = arith.constant 0 : i32
    %c0_i32_2 = arith.constant 0 : i32
    return %c0_i32, %c0_i32_0, %c0_i32_1 : i32, i32, i32
  }
  func.func @transform_4(%arg0: i32, %arg1: i32) -> (i32, i32, i32) {
    %c0_i32 = arith.constant 0 : i32
    %c0_i32_0 = arith.constant 0 : i32
    %c0_i32_1 = arith.constant 0 : i32
    %c0_i32_2 = arith.constant 0 : i32
    return %c0_i32, %c0_i32_0, %c0_i32_1 : i32, i32, i32
  }
  func.func @transform_5(%arg0: i32, %arg1: i32) -> (i32, i32, i32) {
    %c0_i32 = arith.constant 0 : i32
    %c0_i32_0 = arith.constant 0 : i32
    return %arg0, %c0_i32, %arg1 : i32, i32, i32
  }
}

module attributes {stable_mosaic.version = 11 : i64} {
  func.func @_cortex_kernel(%arg0: i32, %arg1: i32, %arg2: memref<1x8x200xf32, #tpu.memory_space<vmem>>, %arg3: memref<3x32x32xf32, #tpu.memory_space<vmem>>, %arg4: memref<3x32x1xf32, #tpu.memory_space<vmem>>, %arg5: memref<3x32x1xf32, #tpu.memory_space<vmem>>, %arg6: memref<3x32x1xf32, #tpu.memory_space<vmem>>, %arg7: memref<1x32x200xf32, #tpu.memory_space<vmem>>) attributes {dimension_semantics = [#tpu.dimension_semantics<parallel>, #tpu.dimension_semantics<parallel>], iteration_bounds = array<i64: 2, 1>, scalar_prefetch = 0 : i64, scratch_operands = 0 : i64, tpu.core_type = #tpu.core_type<tc>, window_params = [{transform_indices = @transform_0, window_bounds = array<i64: 1, 8, 200>}, {pipeline_mode = #tpu.pipeline_mode<synchronous>, transform_indices = @transform_1, window_bounds = array<i64: 3, 32, 32>}, {pipeline_mode = #tpu.pipeline_mode<synchronous>, transform_indices = @transform_2, window_bounds = array<i64: 3, 32, 1>}, {pipeline_mode = #tpu.pipeline_mode<synchronous>, transform_indices = @transform_3, window_bounds = array<i64: 3, 32, 1>}, {pipeline_mode = #tpu.pipeline_mode<synchronous>, transform_indices = @transform_4, window_bounds = array<i64: 3, 32, 1>}, {transform_indices = @transform_5, window_bounds = array<i64: 1, 32, 200>}]} {
    %c0 = arith.constant 0 : index
    %c0_0 = arith.constant 0 : index
    %c0_1 = arith.constant 0 : index
    %0 = vector.load %arg2[%c0, %c0_0, %c0_1] : memref<1x8x200xf32, #tpu.memory_space<vmem>>, vector<1x8x200xf32>
    %1 = vector.shape_cast %0 : vector<1x8x200xf32> to vector<8x200xf32>
    %cst = arith.constant 0.000000e+00 : f32
    %2 = vector.broadcast %cst : f32 to vector<24x200xf32>
    %3 = tpu.concatenate %1, %2 in 0 : vector<8x200xf32>, vector<24x200xf32> -> vector<32x200xf32>
    %c0_2 = arith.constant 0 : index
    %c0_3 = arith.constant 0 : index
    %c0_4 = arith.constant 0 : index
    %4 = vector.load %arg3[%c0_2, %c0_3, %c0_4] : memref<3x32x32xf32, #tpu.memory_space<vmem>>, vector<1x32x32xf32>
    %5 = vector.shape_cast %4 : vector<1x32x32xf32> to vector<32x32xf32>
    %cst_5 = arith.constant dense<0.000000e+00> : vector<32x200xf32>
    %6 = tpu.matmul %5, %3, %cst_5 {dimension_numbers = #tpu.dot_dimension_numbers<[1], [0], [0], [1], [0, 0, 1, 1], [], []>} : vector<32x32xf32>, vector<32x200xf32>, vector<32x200xf32> -> vector<32x200xf32>
    %c0_6 = arith.constant 0 : index
    %c0_7 = arith.constant 0 : index
    %c0_8 = arith.constant 0 : index
    %7 = vector.load %arg4[%c0_6, %c0_7, %c0_8] : memref<3x32x1xf32, #tpu.memory_space<vmem>>, vector<1x32x1xf32>
    %8 = vector.shape_cast %7 : vector<1x32x1xf32> to vector<32x1xf32>
    %9 = vector.broadcast %8 : vector<32x1xf32> to vector<32x200xf32>
    %10 = arith.addf %6, %9 : vector<32x200xf32>
    %cst_9 = arith.constant 0.000000e+00 : f32
    %11 = vector.broadcast %cst_9 : f32 to vector<32x200xf32>
    %12 = arith.maximumf %10, %11 : vector<32x200xf32>
    %13 = vector.extract_strided_slice %3 {offsets = [0, 0], sizes = [8, 200], strides = [1, 1]} : vector<32x200xf32> to vector<8x200xf32>
    %14 = tpu.concatenate %13, %13 in 0 : vector<8x200xf32>, vector<8x200xf32> -> vector<16x200xf32>
    %cst_10 = arith.constant 0.000000e+00 : f32
    %15 = vector.broadcast %cst_10 : f32 to vector<16x200xf32>
    %16 = tpu.concatenate %14, %15 in 0 : vector<16x200xf32>, vector<16x200xf32> -> vector<32x200xf32>
    %c0_11 = arith.constant 0 : index
    %c0_12 = arith.constant 0 : index
    %c0_13 = arith.constant 0 : index
    %17 = vector.load %arg5[%c0_11, %c0_12, %c0_13] : memref<3x32x1xf32, #tpu.memory_space<vmem>>, vector<1x32x1xf32>
    %18 = vector.shape_cast %17 : vector<1x32x1xf32> to vector<32x1xf32>
    %19 = vector.broadcast %18 : vector<32x1xf32> to vector<32x200xf32>
    %20 = arith.mulf %16, %19 : vector<32x200xf32>
    %21 = arith.addf %12, %20 : vector<32x200xf32>
    %c0_14 = arith.constant 0 : index
    %c0_15 = arith.constant 0 : index
    %c0_16 = arith.constant 0 : index
    %22 = vector.load %arg6[%c0_14, %c0_15, %c0_16] : memref<3x32x1xf32, #tpu.memory_space<vmem>>, vector<1x32x1xf32>
    %23 = vector.shape_cast %22 : vector<1x32x1xf32> to vector<32x1xf32>
    %24 = vector.broadcast %23 : vector<32x1xf32> to vector<32x200xf32>
    %25 = arith.addf %21, %24 : vector<32x200xf32>
    %c1 = arith.constant 1 : index
    %c0_17 = arith.constant 0 : index
    %c0_18 = arith.constant 0 : index
    %26 = vector.load %arg3[%c1, %c0_17, %c0_18] : memref<3x32x32xf32, #tpu.memory_space<vmem>>, vector<1x32x32xf32>
    %27 = vector.shape_cast %26 : vector<1x32x32xf32> to vector<32x32xf32>
    %cst_19 = arith.constant dense<0.000000e+00> : vector<32x200xf32>
    %28 = tpu.matmul %27, %25, %cst_19 {dimension_numbers = #tpu.dot_dimension_numbers<[1], [0], [0], [1], [0, 0, 1, 1], [], []>} : vector<32x32xf32>, vector<32x200xf32>, vector<32x200xf32> -> vector<32x200xf32>
    %c1_20 = arith.constant 1 : index
    %c0_21 = arith.constant 0 : index
    %c0_22 = arith.constant 0 : index
    %29 = vector.load %arg4[%c1_20, %c0_21, %c0_22] : memref<3x32x1xf32, #tpu.memory_space<vmem>>, vector<1x32x1xf32>
    %30 = vector.shape_cast %29 : vector<1x32x1xf32> to vector<32x1xf32>
    %31 = vector.broadcast %30 : vector<32x1xf32> to vector<32x200xf32>
    %32 = arith.addf %28, %31 : vector<32x200xf32>
    %cst_23 = arith.constant 0.000000e+00 : f32
    %33 = vector.broadcast %cst_23 : f32 to vector<32x200xf32>
    %34 = arith.maximumf %32, %33 : vector<32x200xf32>
    %35 = vector.extract_strided_slice %25 {offsets = [0, 0], sizes = [16, 200], strides = [1, 1]} : vector<32x200xf32> to vector<16x200xf32>
    %36 = tpu.concatenate %35, %35 in 0 : vector<16x200xf32>, vector<16x200xf32> -> vector<32x200xf32>
    %c1_24 = arith.constant 1 : index
    %c0_25 = arith.constant 0 : index
    %c0_26 = arith.constant 0 : index
    %37 = vector.load %arg5[%c1_24, %c0_25, %c0_26] : memref<3x32x1xf32, #tpu.memory_space<vmem>>, vector<1x32x1xf32>
    %38 = vector.shape_cast %37 : vector<1x32x1xf32> to vector<32x1xf32>
    %39 = vector.broadcast %38 : vector<32x1xf32> to vector<32x200xf32>
    %40 = arith.mulf %36, %39 : vector<32x200xf32>
    %41 = arith.addf %34, %40 : vector<32x200xf32>
    %c1_27 = arith.constant 1 : index
    %c0_28 = arith.constant 0 : index
    %c0_29 = arith.constant 0 : index
    %42 = vector.load %arg6[%c1_27, %c0_28, %c0_29] : memref<3x32x1xf32, #tpu.memory_space<vmem>>, vector<1x32x1xf32>
    %43 = vector.shape_cast %42 : vector<1x32x1xf32> to vector<32x1xf32>
    %44 = vector.broadcast %43 : vector<32x1xf32> to vector<32x200xf32>
    %45 = arith.addf %41, %44 : vector<32x200xf32>
    %c2 = arith.constant 2 : index
    %c0_30 = arith.constant 0 : index
    %c0_31 = arith.constant 0 : index
    %46 = vector.load %arg3[%c2, %c0_30, %c0_31] : memref<3x32x32xf32, #tpu.memory_space<vmem>>, vector<1x32x32xf32>
    %47 = vector.shape_cast %46 : vector<1x32x32xf32> to vector<32x32xf32>
    %cst_32 = arith.constant dense<0.000000e+00> : vector<32x200xf32>
    %48 = tpu.matmul %47, %45, %cst_32 {dimension_numbers = #tpu.dot_dimension_numbers<[1], [0], [0], [1], [0, 0, 1, 1], [], []>} : vector<32x32xf32>, vector<32x200xf32>, vector<32x200xf32> -> vector<32x200xf32>
    %c2_33 = arith.constant 2 : index
    %c0_34 = arith.constant 0 : index
    %c0_35 = arith.constant 0 : index
    %49 = vector.load %arg4[%c2_33, %c0_34, %c0_35] : memref<3x32x1xf32, #tpu.memory_space<vmem>>, vector<1x32x1xf32>
    %50 = vector.shape_cast %49 : vector<1x32x1xf32> to vector<32x1xf32>
    %51 = vector.broadcast %50 : vector<32x1xf32> to vector<32x200xf32>
    %52 = arith.addf %48, %51 : vector<32x200xf32>
    %cst_36 = arith.constant 0.000000e+00 : f32
    %53 = vector.broadcast %cst_36 : f32 to vector<32x200xf32>
    %54 = arith.maximumf %52, %53 : vector<32x200xf32>
    %c2_37 = arith.constant 2 : index
    %c0_38 = arith.constant 0 : index
    %c0_39 = arith.constant 0 : index
    %55 = vector.load %arg5[%c2_37, %c0_38, %c0_39] : memref<3x32x1xf32, #tpu.memory_space<vmem>>, vector<1x32x1xf32>
    %56 = vector.shape_cast %55 : vector<1x32x1xf32> to vector<32x1xf32>
    %57 = vector.broadcast %56 : vector<32x1xf32> to vector<32x200xf32>
    %58 = arith.mulf %45, %57 : vector<32x200xf32>
    %59 = arith.addf %54, %58 : vector<32x200xf32>
    %c2_40 = arith.constant 2 : index
    %c0_41 = arith.constant 0 : index
    %c0_42 = arith.constant 0 : index
    %60 = vector.load %arg6[%c2_40, %c0_41, %c0_42] : memref<3x32x1xf32, #tpu.memory_space<vmem>>, vector<1x32x1xf32>
    %61 = vector.shape_cast %60 : vector<1x32x1xf32> to vector<32x1xf32>
    %62 = vector.broadcast %61 : vector<32x1xf32> to vector<32x200xf32>
    %63 = arith.addf %59, %62 : vector<32x200xf32>
    %c0_43 = arith.constant 0 : index
    %c0_44 = arith.constant 0 : index
    %c0_45 = arith.constant 0 : index
    %64 = vector.load %arg7[%c0_43, %c0_44, %c0_45] : memref<1x32x200xf32, #tpu.memory_space<vmem>>, vector<1x32x200xf32>
    %65 = vector.shape_cast %64 : vector<1x32x200xf32> to vector<32x200xf32>
    %66 = vector.shape_cast %63 : vector<32x200xf32> to vector<1x32x200xf32>
    tpu.vector_store %arg7[%c0_43, %c0_44, %c0_45], %66 {strides = array<i32>} : memref<1x32x200xf32, #tpu.memory_space<vmem>>, vector<1x32x200xf32>,
    return
  }
  func.func @transform_0(%arg0: i32, %arg1: i32) -> (i32, i32, i32) {
    %c0_i32 = arith.constant 0 : i32
    %c0_i32_0 = arith.constant 0 : i32
    return %arg0, %c0_i32, %arg1 : i32, i32, i32
  }
  func.func @transform_1(%arg0: i32, %arg1: i32) -> (i32, i32, i32) {
    %c0_i32 = arith.constant 0 : i32
    %c0_i32_0 = arith.constant 0 : i32
    %c0_i32_1 = arith.constant 0 : i32
    %c0_i32_2 = arith.constant 0 : i32
    return %c0_i32, %c0_i32_0, %c0_i32_1 : i32, i32, i32
  }
  func.func @transform_2(%arg0: i32, %arg1: i32) -> (i32, i32, i32) {
    %c0_i32 = arith.constant 0 : i32
    %c0_i32_0 = arith.constant 0 : i32
    %c0_i32_1 = arith.constant 0 : i32
    %c0_i32_2 = arith.constant 0 : i32
    return %c0_i32, %c0_i32_0, %c0_i32_1 : i32, i32, i32
  }
  func.func @transform_3(%arg0: i32, %arg1: i32) -> (i32, i32, i32) {
    %c0_i32 = arith.constant 0 : i32
    %c0_i32_0 = arith.constant 0 : i32
    %c0_i32_1 = arith.constant 0 : i32
    %c0_i32_2 = arith.constant 0 : i32
    return %c0_i32, %c0_i32_0, %c0_i32_1 : i32, i32, i32
  }
  func.func @transform_4(%arg0: i32, %arg1: i32) -> (i32, i32, i32) {
    %c0_i32 = arith.constant 0 : i32
    %c0_i32_0 = arith.constant 0 : i32
    %c0_i32_1 = arith.constant 0 : i32
    %c0_i32_2 = arith.constant 0 : i32
    return %c0_i32, %c0_i32_0, %c0_i32_1 : i32, i32, i32
  }
  func.func @transform_5(%arg0: i32, %arg1: i32) -> (i32, i32, i32) {
    %c0_i32 = arith.constant 0 : i32
    %c0_i32_0 = arith.constant 0 : i32
    return %arg0, %c0_i32, %arg1 : i32, i32, i32
  }
}

</mosaic_0001>

<llo_original>
// kernel: tpu_custom_call.1
$region0: #{tpu_custom_call.1}
  #allocation0 [shape = 'u32[]', space=smem, size = 0x4, offset = 0x4, fixed_abs, tag = 'smem constant byte address 0x4 - core index']
  #allocation1 [shape = 'u32[72,128]{1,0:T(1,128)}', space=vmem, size = 0x9000, scoped, tag = 'internal scratch']
  %s0 = inlined_call_operand.vmem [shape: f32[2,8,200], index: 0, kind: input, shape index: {}]
  %s1 = inlined_call_operand.vmem [shape: f32[3,32,32], index: 1, kind: input, shape index: {}]
  %s2 = inlined_call_operand.vmem [shape: f32[3,32,1], index: 2, kind: input, shape index: {}]
  %s3 = inlined_call_operand.vmem [shape: f32[3,32,1], index: 3, kind: input, shape index: {}]
  %s4 = inlined_call_operand.vmem [shape: f32[3,32,1], index: 4, kind: input, shape index: {}]
  %s5 = inlined_call_operand.hbm [shape: f32[2,32,200], index: 5, kind: output, shape index: {}]
  %s6 = sld [smem:[#allocation0]]
  $region53: #{tpu_custom_call.1} parent=0
    _
  %s8 = ssub.s32 1, %s6
  %s9 = scalar_select 0, %s8, %s6
  $region1: #{tpu_custom_call.1} parent=0
    #allocation2 [shape = 'u8[65536]{0}', space=vmem, size = 0x10000, scoped, tag = 'output window, operand 0']
    #allocation3 [shape = 's32[2]{0}', space=sflag, size = 0x8, scoped, tag = 'scoped memory for tpu_custom_call.1']
    %10 = vsyncpa [#allocation3], 0
    %s11 = scalar_lea.sflag [#allocation3], 1
    %12 = vsyncpa %s11, 0
    loop: start=0, step=1, limit=4
    $region2: #{tpu_custom_call.1} parent=1 // loop_pre_header
      _
    $region3: #{tpu_custom_call.1} parent=1 // loop_header
      %s14 = sphi 0, %s18
      %p15 = scmp.ge.s32.totalorder %s14, 4
      %s21 = sphi 0, %s33
      %s22 = sphi 0, %s29
      %s23 = sphi 0, %s21
      %s24 = sphi 0, %s22
      %s25 = sphi 0, %s23
      %s26 = sphi 0, %s24
      %s38 = sphi 0, %s40
      %s41 = sphi 0, %s38
      %s42 = sphi 0, %s41
      %s58 = sphi 0, %s42
      %s62 = sphi 0, %s62
      %s64 = sphi 0, %s62
      %s65 = sphi 0, %s64
      %s79 = sphi 0, %s65
      %s83 = sphi 0, %s83
      %s85 = sphi 0, %s83
      %s86 = sphi 0, %s85
      %s100 = sphi 0, %s86
      %s104 = sphi 0, %s104
      %s106 = sphi 0, %s104
      %s107 = sphi 0, %s106
      %s121 = sphi 0, %s107
      %s125 = sphi 0, %s125
      %s127 = sphi 0, %s125
      %s128 = sphi 0, %s127
      %s142 = sphi 0, %s128
      %s150 = sphi 0, %s152
      %s153 = sphi 0, %s150
      %s154 = sphi 0, %s153
      %s170 = sphi 0, %s154
    $region4: #{tpu_custom_call.1} parent=1 // loop_header_branch
      %17 = sbr.rel (%p15) target = $region8
    $region5: #{tpu_custom_call.1} parent=1 // loop_body
      %s19 = ssub.s32 %s14, 1
      %s20 = ssub.s32 %s14, 2
      %s27 = sadd.s32 1, %s22
      %p28 = scmp.ge.s32.totalorder %s27, 1
      %s29 = scalar_select %p28, 0, %s27
      %s30 = sadd.s32 1, %s21
      %s31 = scalar_select %p28, %s30, %s21
      %p32 = scmp.ge.s32.totalorder %s31, 2
      %s33 = scalar_select %p32, 0, %s31
      %s34 = ssub.s32 %s21, %s33
      %s35 = ssub.s32 %s22, %s29
      %s36 = sor.u32 %s34, %s35
      %p37 = scmp.eq.s32.totalorder %s36, 0
      %s39 = sadd.s32 %s38, 1
      %s40 = scalar_select %p37, %s38, %s39
      %p43 = pneg %p37
      %p44 = scmp.eq.s32.totalorder %s14, 1
      %p45 = por %p43, %p44
      %p46 = scmp.ne.s32.totalorder %s38, %s41
      %p47 = scmp.eq.s32.totalorder %s14, 0
      %p48 = por %p46, %p47
      %p49 = scmp.ne.s32.totalorder %s38, %s41
      %p50 = scmp.eq.s32.totalorder %s19, 1
      %p51 = por %p49, %p50
      %p52 = scmp.ne.s32.totalorder %s41, %s42
      %p53 = scmp.eq.s32.totalorder %s19, 0
      %p54 = por %p52, %p53
      %p55 = scmp.ne.s32.totalorder %s41, %s42
      %p56 = scmp.eq.s32.totalorder %s20, 1
      %p57 = por %p55, %p56
      %p59 = scmp.ne.s32.totalorder %s42, %s58
      %p60 = scmp.eq.s32.totalorder %s20, 0
      %p61 = por %p59, %p60
      %s63 = sadd.s32 %s62, 1
      %p66 = scmp.eq.s32.totalorder %s14, 1
      %p67 = scmp.ne.s32.totalorder %s62, %s64
      %p68 = scmp.eq.s32.totalorder %s14, 0
      %p69 = por %p67, %p68
      %p70 = scmp.ne.s32.totalorder %s62, %s64
      %p71 = scmp.eq.s32.totalorder %s19, 1
      %p72 = por %p70, %p71
      %p73 = scmp.ne.s32.totalorder %s64, %s65
      %p74 = scmp.eq.s32.totalorder %s19, 0
      %p75 = por %p73, %p74
      %p76 = scmp.ne.s32.totalorder %s64, %s65
      %p77 = scmp.eq.s32.totalorder %s20, 1
      %p78 = por %p76, %p77
      %p80 = scmp.ne.s32.totalorder %s65, %s79
      %p81 = scmp.eq.s32.totalorder %s20, 0
      %p82 = por %p80, %p81
      %s84 = sadd.s32 %s83, 1
      %p87 = scmp.eq.s32.totalorder %s14, 1
      %p88 = scmp.ne.s32.totalorder %s83, %s85
      %p89 = scmp.eq.s32.totalorder %s14, 0
      %p90 = por %p88, %p89
      %p91 = scmp.ne.s32.totalorder %s83, %s85
      %p92 = scmp.eq.s32.totalorder %s19, 1
      %p93 = por %p91, %p92
      %p94 = scmp.ne.s32.totalorder %s85, %s86
      %p95 = scmp.eq.s32.totalorder %s19, 0
      %p96 = por %p94, %p95
      %p97 = scmp.ne.s32.totalorder %s85, %s86
      %p98 = scmp.eq.s32.totalorder %s20, 1
      %p99 = por %p97, %p98
      %p101 = scmp.ne.s32.totalorder %s86, %s100
      %p102 = scmp.eq.s32.totalorder %s20, 0
      %p103 = por %p101, %p102
      %s105 = sadd.s32 %s104, 1
      %p108 = scmp.eq.s32.totalorder %s14, 1
      %p109 = scmp.ne.s32.totalorder %s104, %s106
      %p110 = scmp.eq.s32.totalorder %s14, 0
      %p111 = por %p109, %p110
      %p112 = scmp.ne.s32.totalorder %s104, %s106
      %p113 = scmp.eq.s32.totalorder %s19, 1
      %p114 = por %p112, %p113
      %p115 = scmp.ne.s32.totalorder %s106, %s107
      %p116 = scmp.eq.s32.totalorder %s19, 0
      %p117 = por %p115, %p116
      %p118 = scmp.ne.s32.totalorder %s106, %s107
      %p119 = scmp.eq.s32.totalorder %s20, 1
      %p120 = por %p118, %p119
      %p122 = scmp.ne.s32.totalorder %s107, %s121
      %p123 = scmp.eq.s32.totalorder %s20, 0
      %p124 = por %p122, %p123
      %s126 = sadd.s32 %s125, 1
      %p129 = scmp.eq.s32.totalorder %s14, 1
      %p130 = scmp.ne.s32.totalorder %s125, %s127
      %p131 = scmp.eq.s32.totalorder %s14, 0
      %p132 = por %p130, %p131
      %p133 = scmp.ne.s32.totalorder %s125, %s127
      %p134 = scmp.eq.s32.totalorder %s19, 1
      %p135 = por %p133, %p134
      %p136 = scmp.ne.s32.totalorder %s127, %s128
      %p137 = scmp.eq.s32.totalorder %s19, 0
      %p138 = por %p136, %p137
      %p139 = scmp.ne.s32.totalorder %s127, %s128
      %p140 = scmp.eq.s32.totalorder %s20, 1
      %p141 = por %p139, %p140
      %p143 = scmp.ne.s32.totalorder %s128, %s142
      %p144 = scmp.eq.s32.totalorder %s20, 0
      %p145 = por %p143, %p144
      %s146 = ssub.s32 %s21, %s33
      %s147 = ssub.s32 %s22, %s29
      %s148 = sor.u32 %s146, %s147
      %p149 = scmp.eq.s32.totalorder %s148, 0
      %s151 = sadd.s32 %s150, 1
      %s152 = scalar_select %p149, %s150, %s151
      %p155 = pneg %p149
      %p156 = scmp.eq.s32.totalorder %s14, 1
      %p157 = por %p155, %p156
      %p158 = scmp.ne.s32.totalorder %s150, %s153
      %p159 = scmp.eq.s32.totalorder %s14, 0
      %p160 = por %p158, %p159
      %p161 = scmp.ne.s32.totalorder %s150, %s153
      %p162 = scmp.eq.s32.totalorder %s19, 1
      %p163 = por %p161, %p162
      %p164 = scmp.ne.s32.totalorder %s153, %s154
      %p165 = scmp.eq.s32.totalorder %s19, 0
      %p166 = por %p164, %p165
      %p167 = scmp.ne.s32.totalorder %s153, %s154
      %p168 = scmp.eq.s32.totalorder %s20, 1
      %p169 = por %p167, %p168
      %p171 = scmp.ne.s32.totalorder %s154, %s170
      %p172 = scmp.eq.s32.totalorder %s20, 0
      %p173 = por %p171, %p172
      %p174 = scmp.le.s32.totalorder 1, %s14
      %p175 = scmp.lt.s32.totalorder %s14, 3
      %p176 = pnand %p174, %p175
      %p177 = pneg %p176
      // Predicated region
      $region9: #{tpu_custom_call.1} parent=5 // pred_check
        _
      $region10: #{tpu_custom_call.1} parent=5 // pred_check_branch
        %179 = sbr.rel (%p176) target = $region12
      $region11: #{tpu_custom_call.1} parent=5 // pred_region
        %s180 = ssub.s32 %s14, 1
        // Predicated region
        $region13: #{tpu_custom_call.1} parent=11 // pred_check
          %p181 = pneg %p75
        $region14: #{tpu_custom_call.1} parent=11 // pred_check_branch
          %183 = sbr.rel (%p181) target = $region16
        $region15: #{tpu_custom_call.1} parent=11 // pred_region
          _
        $region16: #{tpu_custom_call.1} parent=11 // pred_fallthru
          _
        // Predicated region
        $region17: #{tpu_custom_call.1} parent=11 // pred_check
          %p184 = pneg %p96
        $region18: #{tpu_custom_call.1} parent=11 // pred_check_branch
          %186 = sbr.rel (%p184) target = $region20
        $region19: #{tpu_custom_call.1} parent=11 // pred_region
          _
        $region20: #{tpu_custom_call.1} parent=11 // pred_fallthru
          _
        // Predicated region
        $region21: #{tpu_custom_call.1} parent=11 // pred_check
          %p187 = pneg %p117
        $region22: #{tpu_custom_call.1} parent=11 // pred_check_branch
          %189 = sbr.rel (%p187) target = $region24
        $region23: #{tpu_custom_call.1} parent=11 // pred_region
          _
        $region24: #{tpu_custom_call.1} parent=11 // pred_fallthru
          _
        // Predicated region
        $region25: #{tpu_custom_call.1} parent=11 // pred_check
          %p190 = pneg %p138
        $region26: #{tpu_custom_call.1} parent=11 // pred_check_branch
          %192 = sbr.rel (%p190) target = $region28
        $region27: #{tpu_custom_call.1} parent=11 // pred_region
          _
        $region28: #{tpu_custom_call.1} parent=11 // pred_fallthru
          _
      $region12: #{tpu_custom_call.1} parent=5 // pred_fallthru
        _
      %p193 = scmp.lt.s32.totalorder %s14, 2
      // Predicated region
      $region29: #{tpu_custom_call.1} parent=5 // pred_check
        %p194 = pneg %p193
      $region30: #{tpu_custom_call.1} parent=5 // pred_check_branch
        %196 = sbr.rel (%p194) target = $region32
      $region31: #{tpu_custom_call.1} parent=5 // pred_region
        // Predicated region
        $region33: #{tpu_custom_call.1} parent=31 // pred_check
          %p197 = pneg %p48
        $region34: #{tpu_custom_call.1} parent=31 // pred_check_branch
          %199 = sbr.rel (%p197) target = $region36
        $region35: #{tpu_custom_call.1} parent=31 // pred_region
          %s200 = smul.u32 2, %s22
          %p201 = scmp.lt.s32.totalorder %s21, 1
          %s202 = scalar_select %p201, %s21, 1
          %p203 = scmp.lt.s32.totalorder %s200, 1
          %s204 = scalar_select %p203, %s200, 1
          %s205 = smul.addr %s202, 2
          %s206 = sadd.s32 %s204, %s205
          %s207 = smul.addr %s206, 8
          %s208 = scalar_lea.vmem %s0, %s207
          %s209 = smul.u32 2, %s22
        $region36: #{tpu_custom_call.1} parent=31 // pred_fallthru
          _
      $region32: #{tpu_custom_call.1} parent=5 // pred_fallthru
        _
      %p210 = scmp.le.s32.totalorder 1, %s14
      %p211 = scmp.lt.s32.totalorder %s14, 3
      %p212 = pnand %p210, %p211
      %p213 = pneg %p212
      // Predicated region
      $region37: #{tpu_custom_call.1} parent=5 // pred_check
        _
      $region38: #{tpu_custom_call.1} parent=5 // pred_check_branch
        %215 = sbr.rel (%p212) target = $region40
      $region39: #{tpu_custom_call.1} parent=5 // pred_region
        %s216 = ssub.s32 %s14, 1
        %s217 = smul.u32 2, %s24
        %p218 = scmp.lt.s32.totalorder %s23, 1
        %s219 = scalar_select %p218, %s23, 1
        %p220 = scmp.lt.s32.totalorder %s217, 1
        %s221 = scalar_select %p220, %s217, 1
        %s222 = smul.addr %s219, 2
        %s223 = sadd.s32 %s221, %s222
        %s224 = smul.addr %s223, 8
        %s225 = scalar_lea.vmem %s0, %s224
        %p226 = pneg %p54
        %p227 = pneg %p51
        %p228 = pneg %p75
        %p229 = pneg %p72
        %p230 = pneg %p96
        %p231 = pneg %p93
        %p232 = pneg %p117
        %p233 = pneg %p114
        %p234 = pneg %p138
        %p235 = pneg %p135
        %p236 = pneg %p166
        %p237 = pneg %p163
        %s238 = sand.u32 %s153, 1
        %s239 = scalar_lea.sflag [#allocation3], %s238
        %s240 = sand.u32 %s153, 1
        %s241 = smul.addr %s240, 64
        %s242 = scalar_lea.vmem [#allocation2], %s241
        %s243 = smul.u32 2, %s24
        %p244 = scmp.lt.s32.totalorder %s23, 1
        %s245 = scalar_select %p244, %s23, 1
        %p246 = scmp.lt.s32.totalorder %s243, 1
        %s247 = scalar_select %p246, %s243, 1
        %s248 = smul.addr %s245, 2
        %s249 = sadd.s32 %s247, %s248
        %s250 = smul.addr %s249, 8
        %s251 = scalar_lea.vmem %s0, %s250
        %s252 = smul.u32 2, %s24
        %s253 = smul.u32 2, %s24
        %v254 = vld [vmem:[%s251] sm:$0xff]
        %v255 = vld [vmem:[%s251 + $0x8] sm:$0xff]
        %v256 = vld [vmem:[%s1] sm:$0xff]
        %v257 = vld [vmem:[%s1 + $0x8] sm:$0xff]
        %v258 = vld [vmem:[%s1 + $0x10] sm:$0xff]
        %v259 = vld [vmem:[%s1 + $0x18] sm:$0xff]
        %v260 = vld [vmem:[%s2] sm:$0xff]
        %v261 = vld [vmem:[%s2 + $0x8] sm:$0xff]
        %v262 = vld [vmem:[%s2 + $0x10] sm:$0xff]
        %v263 = vld [vmem:[%s2 + $0x18] sm:$0xff]
        %265 = vset.pattern.permute.xlu0 0
        %266 = vperm.xlu0 %265, %v260
        %v267 = vpop.permute.xlu0 %266
        %270 = vset.pattern.permute.xlu0 0
        %271 = vperm.xlu0 %270, %v261
        %v272 = vpop.permute.xlu0 %271
        %275 = vset.pattern.permute.xlu0 0
        %276 = vperm.xlu0 %275, %v262
        %v277 = vpop.permute.xlu0 %276
        %280 = vset.pattern.permute.xlu0 0
        %281 = vperm.xlu0 %280, %v263
        %v282 = vpop.permute.xlu0 %281
        %vm284 = vcmask 261120
        %v286 = vsel %vm284, %v256, 0
        %v289 = vsel %vm284, %v257, 0
        %v292 = vsel %vm284, %v258, 0
        %v295 = vsel %vm284, %v259, 0
        %297 = vmatpush.msra.mxu0 0.0
        %298 = vmatpush.msra.mxu0 0.0
        %299 = vmatpush.msra.mxu0 0.0
        %300 = vmatpush.msra.mxu0 0.0
        %301 = vmatpush.msra.mxu0 0.0
        %302 = vmatpush.msra.mxu0 0.0
        %303 = vmatpush.msra.mxu0 0.0
        %304 = vmatpush.msra.mxu0 0.0
        %305 = vmatpush.msra.mxu0 0.0
        %306 = vmatpush.msra.mxu0 0.0
        %307 = vmatpush.msra.mxu0 0.0
        %308 = vmatpush.msra.mxu0 0.0
        %309 = vmatpush.msra.mxu0 0.0
        %310 = vmatpush.msra.mxu0 0.0
        %311 = vmatpush.msra.mxu0 0.0
        %312 = vmatpush.msra.mxu0 %v254
        %313 = vmatmul.f32.gmra.mxu0 %v286
        %v314 = vpop.f32.mrf.mxu0
        %v315 = vadd.f32 %v267, %v314
        %316 = vmatmul.f32.gmra.mxu0 %v289
        %v317 = vpop.f32.mrf.mxu0
        %v318 = vadd.f32 %v272, %v317
        %319 = vmatmul.f32.gmra.mxu0 %v292
        %v320 = vpop.f32.mrf.mxu0
        %v321 = vadd.f32 %v277, %v320
        %322 = vmatmul.f32.gmra.mxu0 %v295
        %v323 = vpop.f32.mrf.mxu0
        %v324 = vadd.f32 %v282, %v323
        %325 = vdwg.mxu0
        %326 = vmatpush.msra.mxu0 0.0
        %327 = vmatpush.msra.mxu0 0.0
        %328 = vmatpush.msra.mxu0 0.0
        %329 = vmatpush.msra.mxu0 0.0
        %330 = vmatpush.msra.mxu0 0.0
        %331 = vmatpush.msra.mxu0 0.0
        %332 = vmatpush.msra.mxu0 0.0
        %333 = vmatpush.msra.mxu0 0.0
        %334 = vmatpush.msra.mxu0 0.0
        %335 = vmatpush.msra.mxu0 0.0
        %336 = vmatpush.msra.mxu0 0.0
        %337 = vmatpush.msra.mxu0 0.0
        %338 = vmatpush.msra.mxu0 0.0
        %339 = vmatpush.msra.mxu0 0.0
        %340 = vmatpush.msra.mxu0 0.0
        %341 = vmatpush.msra.mxu0 %v255
        %342 = vmatmul.f32.gmra.mxu0 %v286
        %v343 = vpop.f32.mrf.mxu0
        %v344 = vadd.f32 %v267, %v343
        %345 = vmatmul.f32.gmra.mxu0 %v289
        %v346 = vpop.f32.mrf.mxu0
        %v347 = vadd.f32 %v272, %v346
        %348 = vmatmul.f32.gmra.mxu0 %v292
        %v349 = vpop.f32.mrf.mxu0
        %v350 = vadd.f32 %v277, %v349
        %351 = vmatmul.f32.gmra.mxu0 %v295
        %v352 = vpop.f32.mrf.mxu0
        %v353 = vadd.f32 %v282, %v352
        %354 = vdwg.mxu0
        %v355 = vmax.f32 %v315, 0.0
        %v356 = vmax.f32 %v344, 0.0
        %v357 = vmax.f32 %v318, 0.0
        %v358 = vmax.f32 %v347, 0.0
        %v359 = vmax.f32 %v321, 0.0
        %v360 = vmax.f32 %v350, 0.0
        %v361 = vmax.f32 %v324, 0.0
        %v362 = vmax.f32 %v353, 0.0
        %v363 = vld [vmem:[%s3] sm:$0xff]
        %v364 = vld [vmem:[%s3 + $0x8] sm:$0xff]
        %v365 = vld [vmem:[%s3 + $0x10] sm:$0xff]
        %v366 = vld [vmem:[%s3 + $0x18] sm:$0xff]
        %368 = vset.pattern.permute.xlu0 0
        %369 = vperm.xlu0 %368, %v363
        %v370 = vpop.permute.xlu0 %369
        %373 = vset.pattern.permute.xlu0 0
        %374 = vperm.xlu0 %373, %v364
        %v375 = vpop.permute.xlu0 %374
        %378 = vset.pattern.permute.xlu0 0
        %379 = vperm.xlu0 %378, %v365
        %v380 = vpop.permute.xlu0 %379
        %383 = vset.pattern.permute.xlu0 0
        %384 = vperm.xlu0 %383, %v366
        %v385 = vpop.permute.xlu0 %384
        %v387 = vmul.f32 %v254, %v370
        %v388 = vmul.f32 %v255, %v370
        %v389 = vmul.f32 %v254, %v375
        %v390 = vmul.f32 %v255, %v375
        %v391 = vmul.f32 %v380, 0.0
        %v392 = vmul.f32 %v385, 0.0
        %v393 = vadd.f32 %v355, %v387
        %v394 = vadd.f32 %v356, %v388
        %v395 = vadd.f32 %v357, %v389
        %v396 = vadd.f32 %v358, %v390
        %v397 = vadd.f32 %v359, %v391
        %v398 = vadd.f32 %v360, %v391
        %v399 = vadd.f32 %v361, %v392
        %v400 = vadd.f32 %v362, %v392
        %v401 = vld [vmem:[%s4] sm:$0xff]
        %v402 = vld [vmem:[%s4 + $0x8] sm:$0xff]
        %v403 = vld [vmem:[%s4 + $0x10] sm:$0xff]
        %v404 = vld [vmem:[%s4 + $0x18] sm:$0xff]
        %406 = vset.pattern.permute.xlu0 0
        %407 = vperm.xlu0 %406, %v401
        %v408 = vpop.permute.xlu0 %407
        %411 = vset.pattern.permute.xlu0 0
        %412 = vperm.xlu0 %411, %v402
        %v413 = vpop.permute.xlu0 %412
        %416 = vset.pattern.permute.xlu0 0
        %417 = vperm.xlu0 %416, %v403
        %v418 = vpop.permute.xlu0 %417
        %421 = vset.pattern.permute.xlu0 0
        %422 = vperm.xlu0 %421, %v404
        %v423 = vpop.permute.xlu0 %422
        %v425 = vadd.f32 %v393, %v408
        %v426 = vadd.f32 %v394, %v408
        %v427 = vadd.f32 %v395, %v413
        %v428 = vadd.f32 %v396, %v413
        %v429 = vadd.f32 %v397, %v418
        %v430 = vadd.f32 %v398, %v418
        %v431 = vadd.f32 %v399, %v423
        %v432 = vadd.f32 %v400, %v423
        %s433 = scalar_lea.vmem %s1, 32
        %v434 = vld [vmem:[%s433] sm:$0xff]
        %v435 = vld [vmem:[%s433 + $0x8] sm:$0xff]
        %v436 = vld [vmem:[%s433 + $0x10] sm:$0xff]
        %v437 = vld [vmem:[%s433 + $0x18] sm:$0xff]
        %s438 = scalar_lea.vmem %s2, 32
        %v439 = vld [vmem:[%s438] sm:$0xff]
        %v440 = vld [vmem:[%s438 + $0x8] sm:$0xff]
        %v441 = vld [vmem:[%s438 + $0x10] sm:$0xff]
        %v442 = vld [vmem:[%s438 + $0x18] sm:$0xff]
        %444 = vset.pattern.permute.xlu0 0
        %445 = vperm.xlu0 %444, %v439
        %v446 = vpop.permute.xlu0 %445
        %449 = vset.pattern.permute.xlu0 0
        %450 = vperm.xlu0 %449, %v440
        %v451 = vpop.permute.xlu0 %450
        %454 = vset.pattern.permute.xlu0 0
        %455 = vperm.xlu0 %454, %v441
        %v456 = vpop.permute.xlu0 %455
        %459 = vset.pattern.permute.xlu0 0
        %460 = vperm.xlu0 %459, %v442
        %v461 = vpop.permute.xlu0 %460
        %v464 = vsel %vm284, %v434, 0
        %v467 = vsel %vm284, %v435, 0
        %v470 = vsel %vm284, %v436, 0
        %v473 = vsel %vm284, %v437, 0
        %475 = vmatpush.msra.mxu0 0.0
        %476 = vmatpush.msra.mxu0 0.0
        %477 = vmatpush.msra.mxu0 0.0
        %478 = vmatpush.msra.mxu0 0.0
        %479 = vmatpush.msra.mxu0 0.0
        %480 = vmatpush.msra.mxu0 0.0
        %481 = vmatpush.msra.mxu0 0.0
        %482 = vmatpush.msra.mxu0 0.0
        %483 = vmatpush.msra.mxu0 0.0
        %484 = vmatpush.msra.mxu0 0.0
        %485 = vmatpush.msra.mxu0 0.0
        %486 = vmatpush.msra.mxu0 0.0
        %487 = vmatpush.msra.mxu0 %v431
        %488 = vmatpush.msra.mxu0 %v429
        %489 = vmatpush.msra.mxu0 %v427
        %490 = vmatpush.msra.mxu0 %v425
        %491 = vmatmul.f32.gmra.mxu0 %v464
        %v492 = vpop.f32.mrf.mxu0
        %v493 = vadd.f32 %v446, %v492
        %494 = vmatmul.f32.gmra.mxu0 %v467
        %v495 = vpop.f32.mrf.mxu0
        %v496 = vadd.f32 %v451, %v495
        %497 = vmatmul.f32.gmra.mxu0 %v470
        %v498 = vpop.f32.mrf.mxu0
        %v499 = vadd.f32 %v456, %v498
        %500 = vmatmul.f32.gmra.mxu0 %v473
        %v501 = vpop.f32.mrf.mxu0
        %v502 = vadd.f32 %v461, %v501
        %503 = vdwg.mxu0
        %504 = vmatpush.msra.mxu0 0.0
        %505 = vmatpush.msra.mxu0 0.0
        %506 = vmatpush.msra.mxu0 0.0
        %507 = vmatpush.msra.mxu0 0.0
        %508 = vmatpush.msra.mxu0 0.0
        %509 = vmatpush.msra.mxu0 0.0
        %510 = vmatpush.msra.mxu0 0.0
        %511 = vmatpush.msra.mxu0 0.0
        %512 = vmatpush.msra.mxu0 0.0
        %513 = vmatpush.msra.mxu0 0.0
        %514 = vmatpush.msra.mxu0 0.0
        %515 = vmatpush.msra.mxu0 0.0
        %516 = vmatpush.msra.mxu0 %v432
        %517 = vmatpush.msra.mxu0 %v430
        %518 = vmatpush.msra.mxu0 %v428
        %519 = vmatpush.msra.mxu0 %v426
        %520 = vmatmul.f32.gmra.mxu0 %v464
        %v521 = vpop.f32.mrf.mxu0
        %v522 = vadd.f32 %v446, %v521
        %523 = vmatmul.f32.gmra.mxu0 %v467
        %v524 = vpop.f32.mrf.mxu0
        %v525 = vadd.f32 %v451, %v524
        %526 = vmatmul.f32.gmra.mxu0 %v470
        %v527 = vpop.f32.mrf.mxu0
        %v528 = vadd.f32 %v456, %v527
        %529 = vmatmul.f32.gmra.mxu0 %v473
        %v530 = vpop.f32.mrf.mxu0
        %v531 = vadd.f32 %v461, %v530
        %532 = vdwg.mxu0
        %v533 = vmax.f32 %v493, 0.0
        %v534 = vmax.f32 %v522, 0.0
        %v535 = vmax.f32 %v496, 0.0
        %v536 = vmax.f32 %v525, 0.0
        %v537 = vmax.f32 %v499, 0.0
        %v538 = vmax.f32 %v528, 0.0
        %v539 = vmax.f32 %v502, 0.0
        %v540 = vmax.f32 %v531, 0.0
        %s541 = scalar_lea.vmem %s3, 32
        %v542 = vld [vmem:[%s541] sm:$0xff]
        %v543 = vld [vmem:[%s541 + $0x8] sm:$0xff]
        %v544 = vld [vmem:[%s541 + $0x10] sm:$0xff]
        %v545 = vld [vmem:[%s541 + $0x18] sm:$0xff]
        %547 = vset.pattern.permute.xlu0 0
        %548 = vperm.xlu0 %547, %v542
        %v549 = vpop.permute.xlu0 %548
        %552 = vset.pattern.permute.xlu0 0
        %553 = vperm.xlu0 %552, %v543
        %v554 = vpop.permute.xlu0 %553
        %557 = vset.pattern.permute.xlu0 0
        %558 = vperm.xlu0 %557, %v544
        %v559 = vpop.permute.xlu0 %558
        %562 = vset.pattern.permute.xlu0 0
        %563 = vperm.xlu0 %562, %v545
        %v564 = vpop.permute.xlu0 %563
        %v566 = vmul.f32 %v425, %v549
        %v567 = vmul.f32 %v426, %v549
        %v568 = vmul.f32 %v427, %v554
        %v569 = vmul.f32 %v428, %v554
        %v570 = vmul.f32 %v425, %v559
        %v571 = vmul.f32 %v426, %v559
        %v572 = vmul.f32 %v427, %v564
        %v573 = vmul.f32 %v428, %v564
        %v574 = vadd.f32 %v533, %v566
        %v575 = vadd.f32 %v534, %v567
        %v576 = vadd.f32 %v535, %v568
        %v577 = vadd.f32 %v536, %v569
        %v578 = vadd.f32 %v537, %v570
        %v579 = vadd.f32 %v538, %v571
        %v580 = vadd.f32 %v539, %v572
        %v581 = vadd.f32 %v540, %v573
        %s582 = scalar_lea.vmem %s4, 32
        %v583 = vld [vmem:[%s582] sm:$0xff]
        %v584 = vld [vmem:[%s582 + $0x8] sm:$0xff]
        %v585 = vld [vmem:[%s582 + $0x10] sm:$0xff]
        %v586 = vld [vmem:[%s582 + $0x18] sm:$0xff]
        %588 = vset.pattern.permute.xlu0 0
        %589 = vperm.xlu0 %588, %v583
        %v590 = vpop.permute.xlu0 %589
        %593 = vset.pattern.permute.xlu0 0
        %594 = vperm.xlu0 %593, %v584
        %v595 = vpop.permute.xlu0 %594
        %598 = vset.pattern.permute.xlu0 0
        %599 = vperm.xlu0 %598, %v585
        %v600 = vpop.permute.xlu0 %599
        %603 = vset.pattern.permute.xlu0 0
        %604 = vperm.xlu0 %603, %v586
        %v605 = vpop.permute.xlu0 %604
        %v607 = vadd.f32 %v574, %v590
        %v608 = vadd.f32 %v575, %v590
        %v609 = vadd.f32 %v576, %v595
        %v610 = vadd.f32 %v577, %v595
        %v611 = vadd.f32 %v578, %v600
        %v612 = vadd.f32 %v579, %v600
        %v613 = vadd.f32 %v580, %v605
        %v614 = vadd.f32 %v581, %v605
        %s615 = scalar_lea.vmem %s1, 64
        %v616 = vld [vmem:[%s615] sm:$0xff]
        %v617 = vld [vmem:[%s615 + $0x8] sm:$0xff]
        %v618 = vld [vmem:[%s615 + $0x10] sm:$0xff]
        %v619 = vld [vmem:[%s615 + $0x18] sm:$0xff]
        %s620 = scalar_lea.vmem %s2, 64
        %v621 = vld [vmem:[%s620] sm:$0xff]
        %v622 = vld [vmem:[%s620 + $0x8] sm:$0xff]
        %v623 = vld [vmem:[%s620 + $0x10] sm:$0xff]
        %v624 = vld [vmem:[%s620 + $0x18] sm:$0xff]
        %626 = vset.pattern.permute.xlu0 0
        %627 = vperm.xlu0 %626, %v621
        %v628 = vpop.permute.xlu0 %627
        %631 = vset.pattern.permute.xlu0 0
        %632 = vperm.xlu0 %631, %v622
        %v633 = vpop.permute.xlu0 %632
        %636 = vset.pattern.permute.xlu0 0
        %637 = vperm.xlu0 %636, %v623
        %v638 = vpop.permute.xlu0 %637
        %641 = vset.pattern.permute.xlu0 0
        %642 = vperm.xlu0 %641, %v624
        %v643 = vpop.permute.xlu0 %642
        %v646 = vsel %vm284, %v616, 0
        %v649 = vsel %vm284, %v617, 0
        %v652 = vsel %vm284, %v618, 0
        %v655 = vsel %vm284, %v619, 0
        %657 = vmatpush.msra.mxu0 0.0
        %658 = vmatpush.msra.mxu0 0.0
        %659 = vmatpush.msra.mxu0 0.0
        %660 = vmatpush.msra.mxu0 0.0
        %661 = vmatpush.msra.mxu0 0.0
        %662 = vmatpush.msra.mxu0 0.0
        %663 = vmatpush.msra.mxu0 0.0
        %664 = vmatpush.msra.mxu0 0.0
        %665 = vmatpush.msra.mxu0 0.0
        %666 = vmatpush.msra.mxu0 0.0
        %667 = vmatpush.msra.mxu0 0.0
        %668 = vmatpush.msra.mxu0 0.0
        %669 = vmatpush.msra.mxu0 %v613
        %670 = vmatpush.msra.mxu0 %v611
        %671 = vmatpush.msra.mxu0 %v609
        %672 = vmatpush.msra.mxu0 %v607
        %673 = vmatmul.f32.gmra.mxu0 %v646
        %v674 = vpop.f32.mrf.mxu0
        %v675 = vadd.f32 %v628, %v674
        %676 = vmatmul.f32.gmra.mxu0 %v649
        %v677 = vpop.f32.mrf.mxu0
        %v678 = vadd.f32 %v633, %v677
        %679 = vmatmul.f32.gmra.mxu0 %v652
        %v680 = vpop.f32.mrf.mxu0
        %v681 = vadd.f32 %v638, %v680
        %682 = vmatmul.f32.gmra.mxu0 %v655
        %v683 = vpop.f32.mrf.mxu0
        %v684 = vadd.f32 %v643, %v683
        %685 = vdwg.mxu0
        %686 = vmatpush.msra.mxu0 0.0
        %687 = vmatpush.msra.mxu0 0.0
        %688 = vmatpush.msra.mxu0 0.0
        %689 = vmatpush.msra.mxu0 0.0
        %690 = vmatpush.msra.mxu0 0.0
        %691 = vmatpush.msra.mxu0 0.0
        %692 = vmatpush.msra.mxu0 0.0
        %693 = vmatpush.msra.mxu0 0.0
        %694 = vmatpush.msra.mxu0 0.0
        %695 = vmatpush.msra.mxu0 0.0
        %696 = vmatpush.msra.mxu0 0.0
        %697 = vmatpush.msra.mxu0 0.0
        %698 = vmatpush.msra.mxu0 %v614
        %699 = vmatpush.msra.mxu0 %v612
        %700 = vmatpush.msra.mxu0 %v610
        %701 = vmatpush.msra.mxu0 %v608
        %702 = vmatmul.f32.gmra.mxu0 %v646
        %v703 = vpop.f32.mrf.mxu0
        %v704 = vadd.f32 %v628, %v703
        %705 = vmatmul.f32.gmra.mxu0 %v649
        %v706 = vpop.f32.mrf.mxu0
        %v707 = vadd.f32 %v633, %v706
        %708 = vmatmul.f32.gmra.mxu0 %v652
        %v709 = vpop.f32.mrf.mxu0
        %v710 = vadd.f32 %v638, %v709
        %711 = vmatmul.f32.gmra.mxu0 %v655
        %v712 = vpop.f32.mrf.mxu0
        %v713 = vadd.f32 %v643, %v712
        %714 = vdwg.mxu0
        %v715 = vmax.f32 %v675, 0.0
        %v716 = vmax.f32 %v704, 0.0
        %v717 = vmax.f32 %v678, 0.0
        %v718 = vmax.f32 %v707, 0.0
        %v719 = vmax.f32 %v681, 0.0
        %v720 = vmax.f32 %v710, 0.0
        %v721 = vmax.f32 %v684, 0.0
        %v722 = vmax.f32 %v713, 0.0
        %s723 = scalar_lea.vmem %s3, 64
        %v724 = vld [vmem:[%s723] sm:$0xff]
        %v725 = vld [vmem:[%s723 + $0x8] sm:$0xff]
        %v726 = vld [vmem:[%s723 + $0x10] sm:$0xff]
        %v727 = vld [vmem:[%s723 + $0x18] sm:$0xff]
        %729 = vset.pattern.permute.xlu0 0
        %730 = vperm.xlu0 %729, %v724
        %v731 = vpop.permute.xlu0 %730
        %734 = vset.pattern.permute.xlu0 0
        %735 = vperm.xlu0 %734, %v725
        %v736 = vpop.permute.xlu0 %735
        %739 = vset.pattern.permute.xlu0 0
        %740 = vperm.xlu0 %739, %v726
        %v741 = vpop.permute.xlu0 %740
        %744 = vset.pattern.permute.xlu0 0
        %745 = vperm.xlu0 %744, %v727
        %v746 = vpop.permute.xlu0 %745
        %v748 = vmul.f32 %v607, %v731
        %v749 = vmul.f32 %v608, %v731
        %v750 = vmul.f32 %v609, %v736
        %v751 = vmul.f32 %v610, %v736
        %v752 = vmul.f32 %v611, %v741
        %v753 = vmul.f32 %v612, %v741
        %v754 = vmul.f32 %v613, %v746
        %v755 = vmul.f32 %v614, %v746
        %v756 = vadd.f32 %v715, %v748
        %v757 = vadd.f32 %v716, %v749
        %v758 = vadd.f32 %v717, %v750
        %v759 = vadd.f32 %v718, %v751
        %v760 = vadd.f32 %v719, %v752
        %v761 = vadd.f32 %v720, %v753
        %v762 = vadd.f32 %v721, %v754
        %v763 = vadd.f32 %v722, %v755
        %s764 = scalar_lea.vmem %s4, 64
        %v765 = vld [vmem:[%s764] sm:$0xff]
        %v766 = vld [vmem:[%s764 + $0x8] sm:$0xff]
        %v767 = vld [vmem:[%s764 + $0x10] sm:$0xff]
        %v768 = vld [vmem:[%s764 + $0x18] sm:$0xff]
        %770 = vset.pattern.permute.xlu0 0
        %771 = vperm.xlu0 %770, %v765
        %v772 = vpop.permute.xlu0 %771
        %775 = vset.pattern.permute.xlu0 0
        %776 = vperm.xlu0 %775, %v766
        %v777 = vpop.permute.xlu0 %776
        %780 = vset.pattern.permute.xlu0 0
        %781 = vperm.xlu0 %780, %v767
        %v782 = vpop.permute.xlu0 %781
        %785 = vset.pattern.permute.xlu0 0
        %786 = vperm.xlu0 %785, %v768
        %v787 = vpop.permute.xlu0 %786
        %v789 = vadd.f32 %v756, %v772
        %v790 = vadd.f32 %v757, %v772
        %v791 = vadd.f32 %v758, %v777
        %v792 = vadd.f32 %v759, %v777
        %v793 = vadd.f32 %v760, %v782
        %v794 = vadd.f32 %v761, %v782
        %v795 = vadd.f32 %v762, %v787
        %v796 = vadd.f32 %v763, %v787
        %797 = vst [vmem:[%s242] sm:$0xff] %v789
        %vm798 = vcmask 588800
        %799 = vst.msk [vmem:[%s242 + $0x8] sm:$0xff] %vm798, %v790
        %800 = vst [vmem:[%s242 + $0x10] sm:$0xff] %v791
        %801 = vst.msk [vmem:[%s242 + $0x18] sm:$0xff] %vm798, %v792
        %802 = vst [vmem:[%s242 + $0x20] sm:$0xff] %v793
        %803 = vst.msk [vmem:[%s242 + $0x28] sm:$0xff] %vm798, %v794
        %804 = vst [vmem:[%s242 + $0x30] sm:$0xff] %v795
        %805 = vst.msk [vmem:[%s242 + $0x38] sm:$0xff] %vm798, %v796
        %s806 = sand.u32 %s153, 1
        %s807 = scalar_lea.sflag [#allocation3], %s806
        %s808 = sand.u32 %s153, 1
        %s809 = smul.addr %s808, 64
        %s810 = scalar_lea.vmem [#allocation2], %s809
        // Predicated region
        $region41: #{tpu_custom_call.1} parent=39 // pred_check
          %p811 = pneg %p163
        $region42: #{tpu_custom_call.1} parent=39 // pred_check_branch
          %813 = sbr.rel (%p811) target = $region44
        $region43: #{tpu_custom_call.1} parent=39 // pred_region
          %s814 = smul.u32 2, %s24
          %816 = vsyncadd %s807, 0
          %s817 = smul.addr %s23, 8
          %s818 = sadd.s32 %s814, %s817
          %s819 = smul.addr %s818, 8
          %s820 = scalar_lea.hbm %s5, %s819
          %s821 = sshll.u32 %s810, 4
          %s822 = int_to_ptr.vmem [resolvable:$true] %s821
          %s823 = sshll.u32 %s820, 4
          %s824 = int_to_ptr.hbm [resolvable:$true] %s823
          %829 = dma.vmem_to_hbm [thread:$0]  %s822, 1024, %s824, %s807, 256, 256, 16
        $region44: #{tpu_custom_call.1} parent=39 // pred_fallthru
          _
      $region40: #{tpu_custom_call.1} parent=5 // pred_fallthru
        _
      %p830 = scmp.le.s32.totalorder 2, %s14
      // Predicated region
      $region45: #{tpu_custom_call.1} parent=5 // pred_check
        %p831 = pneg %p830
      $region46: #{tpu_custom_call.1} parent=5 // pred_check_branch
        %833 = sbr.rel (%p831) target = $region48
      $region47: #{tpu_custom_call.1} parent=5 // pred_region
        %s834 = ssub.s32 %s14, 2
        // Predicated region
        $region49: #{tpu_custom_call.1} parent=47 // pred_check
          %p835 = pneg %p169
        $region50: #{tpu_custom_call.1} parent=47 // pred_check_branch
          %837 = sbr.rel (%p835) target = $region52
        $region51: #{tpu_custom_call.1} parent=47 // pred_region
          %s838 = sand.u32 %s154, 1
          %s839 = scalar_lea.sflag [#allocation3], %s838
          %s840 = sand.u32 %s154, 1
          %s841 = smul.addr %s840, 64
          %s842 = scalar_lea.vmem [#allocation2], %s841
          %844 = dma.done %s839, 1024
        $region52: #{tpu_custom_call.1} parent=47 // pred_fallthru
          _
      $region48: #{tpu_custom_call.1} parent=5 // pred_fallthru
        _
    $region6: #{tpu_custom_call.1} parent=1 // loop_footer
      %s18 = sadd.s32 1, %s14
    $region7: #{tpu_custom_call.1} parent=1 // loop_footer_branch
      %13 = sbr.rel target = $region3
    $region8: #{tpu_custom_call.1} parent=1 // loop_exit
      _
    %845 = vsyncpa [#allocation3], 1
    %s846 = scalar_lea.sflag [#allocation3], 1
    %847 = vsyncpa %s846, 1

// kernel: tpu_custom_call.1
$region0: #{tpu_custom_call.1}
  #allocation0 [shape = 'u32[]', space=smem, size = 0x4, offset = 0x4, fixed_abs, tag = 'smem constant byte address 0x4 - core index']
  #allocation1 [shape = 'u32[72,128]{1,0:T(1,128)}', space=vmem, size = 0x9000, scoped, tag = 'internal scratch']
  %s0 = inlined_call_operand.vmem [shape: f32[2,8,200], index: 0, kind: input, shape index: {}]
  %s1 = inlined_call_operand.vmem [shape: f32[3,32,32], index: 1, kind: input, shape index: {}]
  %s2 = inlined_call_operand.vmem [shape: f32[3,32,1], index: 2, kind: input, shape index: {}]
  %s3 = inlined_call_operand.vmem [shape: f32[3,32,1], index: 3, kind: input, shape index: {}]
  %s4 = inlined_call_operand.vmem [shape: f32[3,32,1], index: 4, kind: input, shape index: {}]
  %s5 = inlined_call_operand.hbm [shape: f32[2,32,200], index: 5, kind: output, shape index: {}]
  %s6 = sld [smem:[#allocation0]]
  $region53: #{tpu_custom_call.1} parent=0
    _
  %s8 = ssub.s32 1, %s6
  %s9 = scalar_select 0, %s8, %s6
  $region1: #{tpu_custom_call.1} parent=0
    #allocation2 [shape = 'u8[65536]{0}', space=vmem, size = 0x10000, scoped, tag = 'output window, operand 0']
    #allocation3 [shape = 's32[2]{0}', space=sflag, size = 0x8, scoped, tag = 'scoped memory for tpu_custom_call.1']
    %10 = vsyncpa [#allocation3], 0
    %s11 = scalar_lea.sflag [#allocation3], 1
    %12 = vsyncpa %s11, 0
    loop: start=0, step=1, limit=4
    $region2: #{tpu_custom_call.1} parent=1 // loop_pre_header
      _
    $region3: #{tpu_custom_call.1} parent=1 // loop_header
      %s14 = sphi 0, %s18
      %p15 = scmp.ge.s32.totalorder %s14, 4
      %s21 = sphi 0, %s33
      %s22 = sphi 0, %s29
      %s23 = sphi 0, %s21
      %s24 = sphi 0, %s22
      %s25 = sphi 0, %s23
      %s26 = sphi 0, %s24
      %s38 = sphi 0, %s40
      %s41 = sphi 0, %s38
      %s42 = sphi 0, %s41
      %s58 = sphi 0, %s42
      %s62 = sphi 0, %s62
      %s64 = sphi 0, %s62
      %s65 = sphi 0, %s64
      %s79 = sphi 0, %s65
      %s83 = sphi 0, %s83
      %s85 = sphi 0, %s83
      %s86 = sphi 0, %s85
      %s100 = sphi 0, %s86
      %s104 = sphi 0, %s104
      %s106 = sphi 0, %s104
      %s107 = sphi 0, %s106
      %s121 = sphi 0, %s107
      %s125 = sphi 0, %s125
      %s127 = sphi 0, %s125
      %s128 = sphi 0, %s127
      %s142 = sphi 0, %s128
      %s150 = sphi 0, %s152
      %s153 = sphi 0, %s150
      %s154 = sphi 0, %s153
      %s170 = sphi 0, %s154
    $region4: #{tpu_custom_call.1} parent=1 // loop_header_branch
      %17 = sbr.rel (%p15) target = $region8
    $region5: #{tpu_custom_call.1} parent=1 // loop_body
      %s19 = ssub.s32 %s14, 1
      %s20 = ssub.s32 %s14, 2
      %s27 = sadd.s32 1, %s22
      %p28 = scmp.ge.s32.totalorder %s27, 1
      %s29 = scalar_select %p28, 0, %s27
      %s30 = sadd.s32 1, %s21
      %s31 = scalar_select %p28, %s30, %s21
      %p32 = scmp.ge.s32.totalorder %s31, 2
      %s33 = scalar_select %p32, 0, %s31
      %s34 = ssub.s32 %s21, %s33
      %s35 = ssub.s32 %s22, %s29
      %s36 = sor.u32 %s34, %s35
      %p37 = scmp.eq.s32.totalorder %s36, 0
      %s39 = sadd.s32 %s38, 1
      %s40 = scalar_select %p37, %s38, %s39
      %p43 = pneg %p37
      %p44 = scmp.eq.s32.totalorder %s14, 1
      %p45 = por %p43, %p44
      %p46 = scmp.ne.s32.totalorder %s38, %s41
      %p47 = scmp.eq.s32.totalorder %s14, 0
      %p48 = por %p46, %p47
      %p49 = scmp.ne.s32.totalorder %s38, %s41
      %p50 = scmp.eq.s32.totalorder %s19, 1
      %p51 = por %p49, %p50
      %p52 = scmp.ne.s32.totalorder %s41, %s42
      %p53 = scmp.eq.s32.totalorder %s19, 0
      %p54 = por %p52, %p53
      %p55 = scmp.ne.s32.totalorder %s41, %s42
      %p56 = scmp.eq.s32.totalorder %s20, 1
      %p57 = por %p55, %p56
      %p59 = scmp.ne.s32.totalorder %s42, %s58
      %p60 = scmp.eq.s32.totalorder %s20, 0
      %p61 = por %p59, %p60
      %s63 = sadd.s32 %s62, 1
      %p66 = scmp.eq.s32.totalorder %s14, 1
      %p67 = scmp.ne.s32.totalorder %s62, %s64
      %p68 = scmp.eq.s32.totalorder %s14, 0
      %p69 = por %p67, %p68
      %p70 = scmp.ne.s32.totalorder %s62, %s64
      %p71 = scmp.eq.s32.totalorder %s19, 1
      %p72 = por %p70, %p71
      %p73 = scmp.ne.s32.totalorder %s64, %s65
      %p74 = scmp.eq.s32.totalorder %s19, 0
      %p75 = por %p73, %p74
      %p76 = scmp.ne.s32.totalorder %s64, %s65
      %p77 = scmp.eq.s32.totalorder %s20, 1
      %p78 = por %p76, %p77
      %p80 = scmp.ne.s32.totalorder %s65, %s79
      %p81 = scmp.eq.s32.totalorder %s20, 0
      %p82 = por %p80, %p81
      %s84 = sadd.s32 %s83, 1
      %p87 = scmp.eq.s32.totalorder %s14, 1
      %p88 = scmp.ne.s32.totalorder %s83, %s85
      %p89 = scmp.eq.s32.totalorder %s14, 0
      %p90 = por %p88, %p89
      %p91 = scmp.ne.s32.totalorder %s83, %s85
      %p92 = scmp.eq.s32.totalorder %s19, 1
      %p93 = por %p91, %p92
      %p94 = scmp.ne.s32.totalorder %s85, %s86
      %p95 = scmp.eq.s32.totalorder %s19, 0
      %p96 = por %p94, %p95
      %p97 = scmp.ne.s32.totalorder %s85, %s86
      %p98 = scmp.eq.s32.totalorder %s20, 1
      %p99 = por %p97, %p98
      %p101 = scmp.ne.s32.totalorder %s86, %s100
      %p102 = scmp.eq.s32.totalorder %s20, 0
      %p103 = por %p101, %p102
      %s105 = sadd.s32 %s104, 1
      %p108 = scmp.eq.s32.totalorder %s14, 1
      %p109 = scmp.ne.s32.totalorder %s104, %s106
      %p110 = scmp.eq.s32.totalorder %s14, 0
      %p111 = por %p109, %p110
      %p112 = scmp.ne.s32.totalorder %s104, %s106
      %p113 = scmp.eq.s32.totalorder %s19, 1
      %p114 = por %p112, %p113
      %p115 = scmp.ne.s32.totalorder %s106, %s107
      %p116 = scmp.eq.s32.totalorder %s19, 0
      %p117 = por %p115, %p116
      %p118 = scmp.ne.s32.totalorder %s106, %s107
      %p119 = scmp.eq.s32.totalorder %s20, 1
      %p120 = por %p118, %p119
      %p122 = scmp.ne.s32.totalorder %s107, %s121
      %p123 = scmp.eq.s32.totalorder %s20, 0
      %p124 = por %p122, %p123
      %s126 = sadd.s32 %s125, 1
      %p129 = scmp.eq.s32.totalorder %s14, 1
      %p130 = scmp.ne.s32.totalorder %s125, %s127
      %p131 = scmp.eq.s32.totalorder %s14, 0
      %p132 = por %p130, %p131
      %p133 = scmp.ne.s32.totalorder %s125, %s127
      %p134 = scmp.eq.s32.totalorder %s19, 1
      %p135 = por %p133, %p134
      %p136 = scmp.ne.s32.totalorder %s127, %s128
      %p137 = scmp.eq.s32.totalorder %s19, 0
      %p138 = por %p136, %p137
      %p139 = scmp.ne.s32.totalorder %s127, %s128
      %p140 = scmp.eq.s32.totalorder %s20, 1
      %p141 = por %p139, %p140
      %p143 = scmp.ne.s32.totalorder %s128, %s142
      %p144 = scmp.eq.s32.totalorder %s20, 0
      %p145 = por %p143, %p144
      %s146 = ssub.s32 %s21, %s33
      %s147 = ssub.s32 %s22, %s29
      %s148 = sor.u32 %s146, %s147
      %p149 = scmp.eq.s32.totalorder %s148, 0
      %s151 = sadd.s32 %s150, 1
      %s152 = scalar_select %p149, %s150, %s151
      %p155 = pneg %p149
      %p156 = scmp.eq.s32.totalorder %s14, 1
      %p157 = por %p155, %p156
      %p158 = scmp.ne.s32.totalorder %s150, %s153
      %p159 = scmp.eq.s32.totalorder %s14, 0
      %p160 = por %p158, %p159
      %p161 = scmp.ne.s32.totalorder %s150, %s153
      %p162 = scmp.eq.s32.totalorder %s19, 1
      %p163 = por %p161, %p162
      %p164 = scmp.ne.s32.totalorder %s153, %s154
      %p165 = scmp.eq.s32.totalorder %s19, 0
      %p166 = por %p164, %p165
      %p167 = scmp.ne.s32.totalorder %s153, %s154
      %p168 = scmp.eq.s32.totalorder %s20, 1
      %p169 = por %p167, %p168
      %p171 = scmp.ne.s32.totalorder %s154, %s170
      %p172 = scmp.eq.s32.totalorder %s20, 0
      %p173 = por %p171, %p172
      %p174 = scmp.le.s32.totalorder 1, %s14
      %p175 = scmp.lt.s32.totalorder %s14, 3
      %p176 = pnand %p174, %p175
      %p177 = pneg %p176
      // Predicated region
      $region9: #{tpu_custom_call.1} parent=5 // pred_check
        _
      $region10: #{tpu_custom_call.1} parent=5 // pred_check_branch
        %179 = sbr.rel (%p176) target = $region12
      $region11: #{tpu_custom_call.1} parent=5 // pred_region
        %s180 = ssub.s32 %s14, 1
        // Predicated region
        $region13: #{tpu_custom_call.1} parent=11 // pred_check
          %p181 = pneg %p75
        $region14: #{tpu_custom_call.1} parent=11 // pred_check_branch
          %183 = sbr.rel (%p181) target = $region16
        $region15: #{tpu_custom_call.1} parent=11 // pred_region
          _
        $region16: #{tpu_custom_call.1} parent=11 // pred_fallthru
          _
        // Predicated region
        $region17: #{tpu_custom_call.1} parent=11 // pred_check
          %p184 = pneg %p96
        $region18: #{tpu_custom_call.1} parent=11 // pred_check_branch
          %186 = sbr.rel (%p184) target = $region20
        $region19: #{tpu_custom_call.1} parent=11 // pred_region
          _
        $region20: #{tpu_custom_call.1} parent=11 // pred_fallthru
          _
        // Predicated region
        $region21: #{tpu_custom_call.1} parent=11 // pred_check
          %p187 = pneg %p117
        $region22: #{tpu_custom_call.1} parent=11 // pred_check_branch
          %189 = sbr.rel (%p187) target = $region24
        $region23: #{tpu_custom_call.1} parent=11 // pred_region
          _
        $region24: #{tpu_custom_call.1} parent=11 // pred_fallthru
          _
        // Predicated region
        $region25: #{tpu_custom_call.1} parent=11 // pred_check
          %p190 = pneg %p138
        $region26: #{tpu_custom_call.1} parent=11 // pred_check_branch
          %192 = sbr.rel (%p190) target = $region28
        $region27: #{tpu_custom_call.1} parent=11 // pred_region
          _
        $region28: #{tpu_custom_call.1} parent=11 // pred_fallthru
          _
      $region12: #{tpu_custom_call.1} parent=5 // pred_fallthru
        _
      %p193 = scmp.lt.s32.totalorder %s14, 2
      // Predicated region
      $region29: #{tpu_custom_call.1} parent=5 // pred_check
        %p194 = pneg %p193
      $region30: #{tpu_custom_call.1} parent=5 // pred_check_branch
        %196 = sbr.rel (%p194) target = $region32
      $region31: #{tpu_custom_call.1} parent=5 // pred_region
        // Predicated region
        $region33: #{tpu_custom_call.1} parent=31 // pred_check
          %p197 = pneg %p48
        $region34: #{tpu_custom_call.1} parent=31 // pred_check_branch
          %199 = sbr.rel (%p197) target = $region36
        $region35: #{tpu_custom_call.1} parent=31 // pred_region
          %s200 = smul.u32 2, %s22
          %p201 = scmp.lt.s32.totalorder %s21, 1
          %s202 = scalar_select %p201, %s21, 1
          %p203 = scmp.lt.s32.totalorder %s200, 1
          %s204 = scalar_select %p203, %s200, 1
          %s205 = smul.addr %s202, 2
          %s206 = sadd.s32 %s204, %s205
          %s207 = smul.addr %s206, 8
          %s208 = scalar_lea.vmem %s0, %s207
          %s209 = smul.u32 2, %s22
        $region36: #{tpu_custom_call.1} parent=31 // pred_fallthru
          _
      $region32: #{tpu_custom_call.1} parent=5 // pred_fallthru
        _
      %p210 = scmp.le.s32.totalorder 1, %s14
      %p211 = scmp.lt.s32.totalorder %s14, 3
      %p212 = pnand %p210, %p211
      %p213 = pneg %p212
      // Predicated region
      $region37: #{tpu_custom_call.1} parent=5 // pred_check
        _
      $region38: #{tpu_custom_call.1} parent=5 // pred_check_branch
        %215 = sbr.rel (%p212) target = $region40
      $region39: #{tpu_custom_call.1} parent=5 // pred_region
        %s216 = ssub.s32 %s14, 1
        %s217 = smul.u32 2, %s24
        %p218 = scmp.lt.s32.totalorder %s23, 1
        %s219 = scalar_select %p218, %s23, 1
        %p220 = scmp.lt.s32.totalorder %s217, 1
        %s221 = scalar_select %p220, %s217, 1
        %s222 = smul.addr %s219, 2
        %s223 = sadd.s32 %s221, %s222
        %s224 = smul.addr %s223, 8
        %s225 = scalar_lea.vmem %s0, %s224
        %p226 = pneg %p54
        %p227 = pneg %p51
        %p228 = pneg %p75
        %p229 = pneg %p72
        %p230 = pneg %p96
        %p231 = pneg %p93
        %p232 = pneg %p117
        %p233 = pneg %p114
        %p234 = pneg %p138
        %p235 = pneg %p135
        %p236 = pneg %p166
        %p237 = pneg %p163
        %s238 = sand.u32 %s153, 1
        %s239 = scalar_lea.sflag [#allocation3], %s238
        %s240 = sand.u32 %s153, 1
        %s241 = smul.addr %s240, 64
        %s242 = scalar_lea.vmem [#allocation2], %s241
        %s243 = smul.u32 2, %s24
        %p244 = scmp.lt.s32.totalorder %s23, 1
        %s245 = scalar_select %p244, %s23, 1
        %p246 = scmp.lt.s32.totalorder %s243, 1
        %s247 = scalar_select %p246, %s243, 1
        %s248 = smul.addr %s245, 2
        %s249 = sadd.s32 %s247, %s248
        %s250 = smul.addr %s249, 8
        %s251 = scalar_lea.vmem %s0, %s250
        %s252 = smul.u32 2, %s24
        %s253 = smul.u32 2, %s24
        %v254 = vld [vmem:[%s251] sm:$0xff]
        %v255 = vld [vmem:[%s251 + $0x8] sm:$0xff]
        %v256 = vld [vmem:[%s1] sm:$0xff]
        %v257 = vld [vmem:[%s1 + $0x8] sm:$0xff]
        %v258 = vld [vmem:[%s1 + $0x10] sm:$0xff]
        %v259 = vld [vmem:[%s1 + $0x18] sm:$0xff]
        %v260 = vld [vmem:[%s2] sm:$0xff]
        %v261 = vld [vmem:[%s2 + $0x8] sm:$0xff]
        %v262 = vld [vmem:[%s2 + $0x10] sm:$0xff]
        %v263 = vld [vmem:[%s2 + $0x18] sm:$0xff]
        %265 = vset.pattern.permute.xlu0 0
        %266 = vperm.xlu0 %265, %v260
        %v267 = vpop.permute.xlu0 %266
        %270 = vset.pattern.permute.xlu0 0
        %271 = vperm.xlu0 %270, %v261
        %v272 = vpop.permute.xlu0 %271
        %275 = vset.pattern.permute.xlu0 0
        %276 = vperm.xlu0 %275, %v262
        %v277 = vpop.permute.xlu0 %276
        %280 = vset.pattern.permute.xlu0 0
        %281 = vperm.xlu0 %280, %v263
        %v282 = vpop.permute.xlu0 %281
        %vm284 = vcmask 261120
        %v286 = vsel %vm284, %v256, 0
        %v289 = vsel %vm284, %v257, 0
        %v292 = vsel %vm284, %v258, 0
        %v295 = vsel %vm284, %v259, 0
        %297 = vmatpush.msra.mxu0 0.0
        %298 = vmatpush.msra.mxu0 0.0
        %299 = vmatpush.msra.mxu0 0.0
        %300 = vmatpush.msra.mxu0 0.0
        %301 = vmatpush.msra.mxu0 0.0
        %302 = vmatpush.msra.mxu0 0.0
        %303 = vmatpush.msra.mxu0 0.0
        %304 = vmatpush.msra.mxu0 0.0
        %305 = vmatpush.msra.mxu0 0.0
        %306 = vmatpush.msra.mxu0 0.0
        %307 = vmatpush.msra.mxu0 0.0
        %308 = vmatpush.msra.mxu0 0.0
        %309 = vmatpush.msra.mxu0 0.0
        %310 = vmatpush.msra.mxu0 0.0
        %311 = vmatpush.msra.mxu0 0.0
        %312 = vmatpush.msra.mxu0 %v254
        %313 = vmatmul.f32.gmra.mxu0 %v286
        %v314 = vpop.f32.mrf.mxu0
        %v315 = vadd.f32 %v267, %v314
        %316 = vmatmul.f32.gmra.mxu0 %v289
        %v317 = vpop.f32.mrf.mxu0
        %v318 = vadd.f32 %v272, %v317
        %319 = vmatmul.f32.gmra.mxu0 %v292
        %v320 = vpop.f32.mrf.mxu0
        %v321 = vadd.f32 %v277, %v320
        %322 = vmatmul.f32.gmra.mxu0 %v295
        %v323 = vpop.f32.mrf.mxu0
        %v324 = vadd.f32 %v282, %v323
        %325 = vdwg.mxu0
        %326 = vmatpush.msra.mxu0 0.0
        %327 = vmatpush.msra.mxu0 0.0
        %328 = vmatpush.msra.mxu0 0.0
        %329 = vmatpush.msra.mxu0 0.0
        %330 = vmatpush.msra.mxu0 0.0
        %331 = vmatpush.msra.mxu0 0.0
        %332 = vmatpush.msra.mxu0 0.0
        %333 = vmatpush.msra.mxu0 0.0
        %334 = vmatpush.msra.mxu0 0.0
        %335 = vmatpush.msra.mxu0 0.0
        %336 = vmatpush.msra.mxu0 0.0
        %337 = vmatpush.msra.mxu0 0.0
        %338 = vmatpush.msra.mxu0 0.0
        %339 = vmatpush.msra.mxu0 0.0
        %340 = vmatpush.msra.mxu0 0.0
        %341 = vmatpush.msra.mxu0 %v255
        %342 = vmatmul.f32.gmra.mxu0 %v286
        %v343 = vpop.f32.mrf.mxu0
        %v344 = vadd.f32 %v267, %v343
        %345 = vmatmul.f32.gmra.mxu0 %v289
        %v346 = vpop.f32.mrf.mxu0
        %v347 = vadd.f32 %v272, %v346
        %348 = vmatmul.f32.gmra.mxu0 %v292
        %v349 = vpop.f32.mrf.mxu0
        %v350 = vadd.f32 %v277, %v349
        %351 = vmatmul.f32.gmra.mxu0 %v295
        %v352 = vpop.f32.mrf.mxu0
        %v353 = vadd.f32 %v282, %v352
        %354 = vdwg.mxu0
        %v355 = vmax.f32 %v315, 0.0
        %v356 = vmax.f32 %v344, 0.0
        %v357 = vmax.f32 %v318, 0.0
        %v358 = vmax.f32 %v347, 0.0
        %v359 = vmax.f32 %v321, 0.0
        %v360 = vmax.f32 %v350, 0.0
        %v361 = vmax.f32 %v324, 0.0
        %v362 = vmax.f32 %v353, 0.0
        %v363 = vld [vmem:[%s3] sm:$0xff]
        %v364 = vld [vmem:[%s3 + $0x8] sm:$0xff]
        %v365 = vld [vmem:[%s3 + $0x10] sm:$0xff]
        %v366 = vld [vmem:[%s3 + $0x18] sm:$0xff]
        %368 = vset.pattern.permute.xlu0 0
        %369 = vperm.xlu0 %368, %v363
        %v370 = vpop.permute.xlu0 %369
        %373 = vset.pattern.permute.xlu0 0
        %374 = vperm.xlu0 %373, %v364
        %v375 = vpop.permute.xlu0 %374
        %378 = vset.pattern.permute.xlu0 0
        %379 = vperm.xlu0 %378, %v365
        %v380 = vpop.permute.xlu0 %379
        %383 = vset.pattern.permute.xlu0 0
        %384 = vperm.xlu0 %383, %v366
        %v385 = vpop.permute.xlu0 %384
        %v387 = vmul.f32 %v254, %v370
        %v388 = vmul.f32 %v255, %v370
        %v389 = vmul.f32 %v254, %v375
        %v390 = vmul.f32 %v255, %v375
        %v391 = vmul.f32 %v380, 0.0
        %v392 = vmul.f32 %v385, 0.0
        %v393 = vadd.f32 %v355, %v387
        %v394 = vadd.f32 %v356, %v388
        %v395 = vadd.f32 %v357, %v389
        %v396 = vadd.f32 %v358, %v390
        %v397 = vadd.f32 %v359, %v391
        %v398 = vadd.f32 %v360, %v391
        %v399 = vadd.f32 %v361, %v392
        %v400 = vadd.f32 %v362, %v392
        %v401 = vld [vmem:[%s4] sm:$0xff]
        %v402 = vld [vmem:[%s4 + $0x8] sm:$0xff]
        %v403 = vld [vmem:[%s4 + $0x10] sm:$0xff]
        %v404 = vld [vmem:[%s4 + $0x18] sm:$0xff]
        %406 = vset.pattern.permute.xlu0 0
        %407 = vperm.xlu0 %406, %v401
        %v408 = vpop.permute.xlu0 %407
        %411 = vset.pattern.permute.xlu0 0
        %412 = vperm.xlu0 %411, %v402
        %v413 = vpop.permute.xlu0 %412
        %416 = vset.pattern.permute.xlu0 0
        %417 = vperm.xlu0 %416, %v403
        %v418 = vpop.permute.xlu0 %417
        %421 = vset.pattern.permute.xlu0 0
        %422 = vperm.xlu0 %421, %v404
        %v423 = vpop.permute.xlu0 %422
        %v425 = vadd.f32 %v393, %v408
        %v426 = vadd.f32 %v394, %v408
        %v427 = vadd.f32 %v395, %v413
        %v428 = vadd.f32 %v396, %v413
        %v429 = vadd.f32 %v397, %v418
        %v430 = vadd.f32 %v398, %v418
        %v431 = vadd.f32 %v399, %v423
        %v432 = vadd.f32 %v400, %v423
        %s433 = scalar_lea.vmem %s1, 32
        %v434 = vld [vmem:[%s433] sm:$0xff]
        %v435 = vld [vmem:[%s433 + $0x8] sm:$0xff]
        %v436 = vld [vmem:[%s433 + $0x10] sm:$0xff]
        %v437 = vld [vmem:[%s433 + $0x18] sm:$0xff]
        %s438 = scalar_lea.vmem %s2, 32
        %v439 = vld [vmem:[%s438] sm:$0xff]
        %v440 = vld [vmem:[%s438 + $0x8] sm:$0xff]
        %v441 = vld [vmem:[%s438 + $0x10] sm:$0xff]
        %v442 = vld [vmem:[%s438 + $0x18] sm:$0xff]
        %444 = vset.pattern.permute.xlu0 0
        %445 = vperm.xlu0 %444, %v439
        %v446 = vpop.permute.xlu0 %445
        %449 = vset.pattern.permute.xlu0 0
        %450 = vperm.xlu0 %449, %v440
        %v451 = vpop.permute.xlu0 %450
        %454 = vset.pattern.permute.xlu0 0
        %455 = vperm.xlu0 %454, %v441
        %v456 = vpop.permute.xlu0 %455
        %459 = vset.pattern.permute.xlu0 0
        %460 = vperm.xlu0 %459, %v442
        %v461 = vpop.permute.xlu0 %460
        %v464 = vsel %vm284, %v434, 0
        %v467 = vsel %vm284, %v435, 0
        %v470 = vsel %vm284, %v436, 0
        %v473 = vsel %vm284, %v437, 0
        %475 = vmatpush.msra.mxu0 0.0
        %476 = vmatpush.msra.mxu0 0.0
        %477 = vmatpush.msra.mxu0 0.0
        %478 = vmatpush.msra.mxu0 0.0
        %479 = vmatpush.msra.mxu0 0.0
        %480 = vmatpush.msra.mxu0 0.0
        %481 = vmatpush.msra.mxu0 0.0
        %482 = vmatpush.msra.mxu0 0.0
        %483 = vmatpush.msra.mxu0 0.0
        %484 = vmatpush.msra.mxu0 0.0
        %485 = vmatpush.msra.mxu0 0.0
        %486 = vmatpush.msra.mxu0 0.0
        %487 = vmatpush.msra.mxu0 %v431
        %488 = vmatpush.msra.mxu0 %v429
        %489 = vmatpush.msra.mxu0 %v427
        %490 = vmatpush.msra.mxu0 %v425
        %491 = vmatmul.f32.gmra.mxu0 %v464
        %v492 = vpop.f32.mrf.mxu0
        %v493 = vadd.f32 %v446, %v492
        %494 = vmatmul.f32.gmra.mxu0 %v467
        %v495 = vpop.f32.mrf.mxu0
        %v496 = vadd.f32 %v451, %v495
        %497 = vmatmul.f32.gmra.mxu0 %v470
        %v498 = vpop.f32.mrf.mxu0
        %v499 = vadd.f32 %v456, %v498
        %500 = vmatmul.f32.gmra.mxu0 %v473
        %v501 = vpop.f32.mrf.mxu0
        %v502 = vadd.f32 %v461, %v501
        %503 = vdwg.mxu0
        %504 = vmatpush.msra.mxu0 0.0
        %505 = vmatpush.msra.mxu0 0.0
        %506 = vmatpush.msra.mxu0 0.0
        %507 = vmatpush.msra.mxu0 0.0
        %508 = vmatpush.msra.mxu0 0.0
        %509 = vmatpush.msra.mxu0 0.0
        %510 = vmatpush.msra.mxu0 0.0
        %511 = vmatpush.msra.mxu0 0.0
        %512 = vmatpush.msra.mxu0 0.0
        %513 = vmatpush.msra.mxu0 0.0
        %514 = vmatpush.msra.mxu0 0.0
        %515 = vmatpush.msra.mxu0 0.0
        %516 = vmatpush.msra.mxu0 %v432
        %517 = vmatpush.msra.mxu0 %v430
        %518 = vmatpush.msra.mxu0 %v428
        %519 = vmatpush.msra.mxu0 %v426
        %520 = vmatmul.f32.gmra.mxu0 %v464
        %v521 = vpop.f32.mrf.mxu0
        %v522 = vadd.f32 %v446, %v521
        %523 = vmatmul.f32.gmra.mxu0 %v467
        %v524 = vpop.f32.mrf.mxu0
        %v525 = vadd.f32 %v451, %v524
        %526 = vmatmul.f32.gmra.mxu0 %v470
        %v527 = vpop.f32.mrf.mxu0
        %v528 = vadd.f32 %v456, %v527
        %529 = vmatmul.f32.gmra.mxu0 %v473
        %v530 = vpop.f32.mrf.mxu0
        %v531 = vadd.f32 %v461, %v530
        %532 = vdwg.mxu0
        %v533 = vmax.f32 %v493, 0.0
        %v534 = vmax.f32 %v522, 0.0
        %v535 = vmax.f32 %v496, 0.0
        %v536 = vmax.f32 %v525, 0.0
        %v537 = vmax.f32 %v499, 0.0
        %v538 = vmax.f32 %v528, 0.0
        %v539 = vmax.f32 %v502, 0.0
        %v540 = vmax.f32 %v531, 0.0
        %s541 = scalar_lea.vmem %s3, 32
        %v542 = vld [vmem:[%s541] sm:$0xff]
        %v543 = vld [vmem:[%s541 + $0x8] sm:$0xff]
        %v544 = vld [vmem:[%s541 + $0x10] sm:$0xff]
        %v545 = vld [vmem:[%s541 + $0x18] sm:$0xff]
        %547 = vset.pattern.permute.xlu0 0
        %548 = vperm.xlu0 %547, %v542
        %v549 = vpop.permute.xlu0 %548
        %552 = vset.pattern.permute.xlu0 0
        %553 = vperm.xlu0 %552, %v543
        %v554 = vpop.permute.xlu0 %553
        %557 = vset.pattern.permute.xlu0 0
        %558 = vperm.xlu0 %557, %v544
        %v559 = vpop.permute.xlu0 %558
        %562 = vset.pattern.permute.xlu0 0
        %563 = vperm.xlu0 %562, %v545
        %v564 = vpop.permute.xlu0 %563
        %v566 = vmul.f32 %v425, %v549
        %v567 = vmul.f32 %v426, %v549
        %v568 = vmul.f32 %v427, %v554
        %v569 = vmul.f32 %v428, %v554
        %v570 = vmul.f32 %v425, %v559
        %v571 = vmul.f32 %v426, %v559
        %v572 = vmul.f32 %v427, %v564
        %v573 = vmul.f32 %v428, %v564
        %v574 = vadd.f32 %v533, %v566
        %v575 = vadd.f32 %v534, %v567
        %v576 = vadd.f32 %v535, %v568
        %v577 = vadd.f32 %v536, %v569
        %v578 = vadd.f32 %v537, %v570
        %v579 = vadd.f32 %v538, %v571
        %v580 = vadd.f32 %v539, %v572
        %v581 = vadd.f32 %v540, %v573
        %s582 = scalar_lea.vmem %s4, 32
        %v583 = vld [vmem:[%s582] sm:$0xff]
        %v584 = vld [vmem:[%s582 + $0x8] sm:$0xff]
        %v585 = vld [vmem:[%s582 + $0x10] sm:$0xff]
        %v586 = vld [vmem:[%s582 + $0x18] sm:$0xff]
        %588 = vset.pattern.permute.xlu0 0
        %589 = vperm.xlu0 %588, %v583
        %v590 = vpop.permute.xlu0 %589
        %593 = vset.pattern.permute.xlu0 0
        %594 = vperm.xlu0 %593, %v584
        %v595 = vpop.permute.xlu0 %594
        %598 = vset.pattern.permute.xlu0 0
        %599 = vperm.xlu0 %598, %v585
        %v600 = vpop.permute.xlu0 %599
        %603 = vset.pattern.permute.xlu0 0
        %604 = vperm.xlu0 %603, %v586
        %v605 = vpop.permute.xlu0 %604
        %v607 = vadd.f32 %v574, %v590
        %v608 = vadd.f32 %v575, %v590
        %v609 = vadd.f32 %v576, %v595
        %v610 = vadd.f32 %v577, %v595
        %v611 = vadd.f32 %v578, %v600
        %v612 = vadd.f32 %v579, %v600
        %v613 = vadd.f32 %v580, %v605
        %v614 = vadd.f32 %v581, %v605
        %s615 = scalar_lea.vmem %s1, 64
        %v616 = vld [vmem:[%s615] sm:$0xff]
        %v617 = vld [vmem:[%s615 + $0x8] sm:$0xff]
        %v618 = vld [vmem:[%s615 + $0x10] sm:$0xff]
        %v619 = vld [vmem:[%s615 + $0x18] sm:$0xff]
        %s620 = scalar_lea.vmem %s2, 64
        %v621 = vld [vmem:[%s620] sm:$0xff]
        %v622 = vld [vmem:[%s620 + $0x8] sm:$0xff]
        %v623 = vld [vmem:[%s620 + $0x10] sm:$0xff]
        %v624 = vld [vmem:[%s620 + $0x18] sm:$0xff]
        %626 = vset.pattern.permute.xlu0 0
        %627 = vperm.xlu0 %626, %v621
        %v628 = vpop.permute.xlu0 %627
        %631 = vset.pattern.permute.xlu0 0
        %632 = vperm.xlu0 %631, %v622
        %v633 = vpop.permute.xlu0 %632
        %636 = vset.pattern.permute.xlu0 0
        %637 = vperm.xlu0 %636, %v623
        %v638 = vpop.permute.xlu0 %637
        %641 = vset.pattern.permute.xlu0 0
        %642 = vperm.xlu0 %641, %v624
        %v643 = vpop.permute.xlu0 %642
        %v646 = vsel %vm284, %v616, 0
        %v649 = vsel %vm284, %v617, 0
        %v652 = vsel %vm284, %v618, 0
        %v655 = vsel %vm284, %v619, 0
        %657 = vmatpush.msra.mxu0 0.0
        %658 = vmatpush.msra.mxu0 0.0
        %659 = vmatpush.msra.mxu0 0.0
        %660 = vmatpush.msra.mxu0 0.0
        %661 = vmatpush.msra.mxu0 0.0
        %662 = vmatpush.msra.mxu0 0.0
        %663 = vmatpush.msra.mxu0 0.0
        %664 = vmatpush.msra.mxu0 0.0
        %665 = vmatpush.msra.mxu0 0.0
        %666 = vmatpush.msra.mxu0 0.0
        %667 = vmatpush.msra.mxu0 0.0
        %668 = vmatpush.msra.mxu0 0.0
        %669 = vmatpush.msra.mxu0 %v613
        %670 = vmatpush.msra.mxu0 %v611
        %671 = vmatpush.msra.mxu0 %v609
        %672 = vmatpush.msra.mxu0 %v607
        %673 = vmatmul.f32.gmra.mxu0 %v646
        %v674 = vpop.f32.mrf.mxu0
        %v675 = vadd.f32 %v628, %v674
        %676 = vmatmul.f32.gmra.mxu0 %v649
        %v677 = vpop.f32.mrf.mxu0
        %v678 = vadd.f32 %v633, %v677
        %679 = vmatmul.f32.gmra.mxu0 %v652
        %v680 = vpop.f32.mrf.mxu0
        %v681 = vadd.f32 %v638, %v680
        %682 = vmatmul.f32.gmra.mxu0 %v655
        %v683 = vpop.f32.mrf.mxu0
        %v684 = vadd.f32 %v643, %v683
        %685 = vdwg.mxu0
        %686 = vmatpush.msra.mxu0 0.0
        %687 = vmatpush.msra.mxu0 0.0
        %688 = vmatpush.msra.mxu0 0.0
        %689 = vmatpush.msra.mxu0 0.0
        %690 = vmatpush.msra.mxu0 0.0
        %691 = vmatpush.msra.mxu0 0.0
        %692 = vmatpush.msra.mxu0 0.0
        %693 = vmatpush.msra.mxu0 0.0
        %694 = vmatpush.msra.mxu0 0.0
        %695 = vmatpush.msra.mxu0 0.0
        %696 = vmatpush.msra.mxu0 0.0
        %697 = vmatpush.msra.mxu0 0.0
        %698 = vmatpush.msra.mxu0 %v614
        %699 = vmatpush.msra.mxu0 %v612
        %700 = vmatpush.msra.mxu0 %v610
        %701 = vmatpush.msra.mxu0 %v608
        %702 = vmatmul.f32.gmra.mxu0 %v646
        %v703 = vpop.f32.mrf.mxu0
        %v704 = vadd.f32 %v628, %v703
        %705 = vmatmul.f32.gmra.mxu0 %v649
        %v706 = vpop.f32.mrf.mxu0
        %v707 = vadd.f32 %v633, %v706
        %708 = vmatmul.f32.gmra.mxu0 %v652
        %v709 = vpop.f32.mrf.mxu0
        %v710 = vadd.f32 %v638, %v709
        %711 = vmatmul.f32.gmra.mxu0 %v655
        %v712 = vpop.f32.mrf.mxu0
        %v713 = vadd.f32 %v643, %v712
        %714 = vdwg.mxu0
        %v715 = vmax.f32 %v675, 0.0
        %v716 = vmax.f32 %v704, 0.0
        %v717 = vmax.f32 %v678, 0.0
        %v718 = vmax.f32 %v707, 0.0
        %v719 = vmax.f32 %v681, 0.0
        %v720 = vmax.f32 %v710, 0.0
        %v721 = vmax.f32 %v684, 0.0
        %v722 = vmax.f32 %v713, 0.0
        %s723 = scalar_lea.vmem %s3, 64
        %v724 = vld [vmem:[%s723] sm:$0xff]
        %v725 = vld [vmem:[%s723 + $0x8] sm:$0xff]
        %v726 = vld [vmem:[%s723 + $0x10] sm:$0xff]
        %v727 = vld [vmem:[%s723 + $0x18] sm:$0xff]
        %729 = vset.pattern.permute.xlu0 0
        %730 = vperm.xlu0 %729, %v724
        %v731 = vpop.permute.xlu0 %730
        %734 = vset.pattern.permute.xlu0 0
        %735 = vperm.xlu0 %734, %v725
        %v736 = vpop.permute.xlu0 %735
        %739 = vset.pattern.permute.xlu0 0
        %740 = vperm.xlu0 %739, %v726
        %v741 = vpop.permute.xlu0 %740
        %744 = vset.pattern.permute.xlu0 0
        %745 = vperm.xlu0 %744, %v727
        %v746 = vpop.permute.xlu0 %745
        %v748 = vmul.f32 %v607, %v731
        %v749 = vmul.f32 %v608, %v731
        %v750 = vmul.f32 %v609, %v736
        %v751 = vmul.f32 %v610, %v736
        %v752 = vmul.f32 %v611, %v741
        %v753 = vmul.f32 %v612, %v741
        %v754 = vmul.f32 %v613, %v746
        %v755 = vmul.f32 %v614, %v746
        %v756 = vadd.f32 %v715, %v748
        %v757 = vadd.f32 %v716, %v749
        %v758 = vadd.f32 %v717, %v750
        %v759 = vadd.f32 %v718, %v751
        %v760 = vadd.f32 %v719, %v752
        %v761 = vadd.f32 %v720, %v753
        %v762 = vadd.f32 %v721, %v754
        %v763 = vadd.f32 %v722, %v755
        %s764 = scalar_lea.vmem %s4, 64
        %v765 = vld [vmem:[%s764] sm:$0xff]
        %v766 = vld [vmem:[%s764 + $0x8] sm:$0xff]
        %v767 = vld [vmem:[%s764 + $0x10] sm:$0xff]
        %v768 = vld [vmem:[%s764 + $0x18] sm:$0xff]
        %770 = vset.pattern.permute.xlu0 0
        %771 = vperm.xlu0 %770, %v765
        %v772 = vpop.permute.xlu0 %771
        %775 = vset.pattern.permute.xlu0 0
        %776 = vperm.xlu0 %775, %v766
        %v777 = vpop.permute.xlu0 %776
        %780 = vset.pattern.permute.xlu0 0
        %781 = vperm.xlu0 %780, %v767
        %v782 = vpop.permute.xlu0 %781
        %785 = vset.pattern.permute.xlu0 0
        %786 = vperm.xlu0 %785, %v768
        %v787 = vpop.permute.xlu0 %786
        %v789 = vadd.f32 %v756, %v772
        %v790 = vadd.f32 %v757, %v772
        %v791 = vadd.f32 %v758, %v777
        %v792 = vadd.f32 %v759, %v777
        %v793 = vadd.f32 %v760, %v782
        %v794 = vadd.f32 %v761, %v782
        %v795 = vadd.f32 %v762, %v787
        %v796 = vadd.f32 %v763, %v787
        %797 = vst [vmem:[%s242] sm:$0xff] %v789
        %vm798 = vcmask 588800
        %799 = vst.msk [vmem:[%s242 + $0x8] sm:$0xff] %vm798, %v790
        %800 = vst [vmem:[%s242 + $0x10] sm:$0xff] %v791
        %801 = vst.msk [vmem:[%s242 + $0x18] sm:$0xff] %vm798, %v792
        %802 = vst [vmem:[%s242 + $0x20] sm:$0xff] %v793
        %803 = vst.msk [vmem:[%s242 + $0x28] sm:$0xff] %vm798, %v794
        %804 = vst [vmem:[%s242 + $0x30] sm:$0xff] %v795
        %805 = vst.msk [vmem:[%s242 + $0x38] sm:$0xff] %vm798, %v796
        %s806 = sand.u32 %s153, 1
        %s807 = scalar_lea.sflag [#allocation3], %s806
        %s808 = sand.u32 %s153, 1
        %s809 = smul.addr %s808, 64
        %s810 = scalar_lea.vmem [#allocation2], %s809
        // Predicated region
        $region41: #{tpu_custom_call.1} parent=39 // pred_check
          %p811 = pneg %p163
        $region42: #{tpu_custom_call.1} parent=39 // pred_check_branch
          %813 = sbr.rel (%p811) target = $region44
        $region43: #{tpu_custom_call.1} parent=39 // pred_region
          %s814 = smul.u32 2, %s24
          %816 = vsyncadd %s807, 0
          %s817 = smul.addr %s23, 8
          %s818 = sadd.s32 %s814, %s817
          %s819 = smul.addr %s818, 8
          %s820 = scalar_lea.hbm %s5, %s819
          %s821 = sshll.u32 %s810, 4
          %s822 = int_to_ptr.vmem [resolvable:$true] %s821
          %s823 = sshll.u32 %s820, 4
          %s824 = int_to_ptr.hbm [resolvable:$true] %s823
          %829 = dma.vmem_to_hbm [thread:$0]  %s822, 1024, %s824, %s807, 256, 256, 16
        $region44: #{tpu_custom_call.1} parent=39 // pred_fallthru
          _
      $region40: #{tpu_custom_call.1} parent=5 // pred_fallthru
        _
      %p830 = scmp.le.s32.totalorder 2, %s14
      // Predicated region
      $region45: #{tpu_custom_call.1} parent=5 // pred_check
        %p831 = pneg %p830
      $region46: #{tpu_custom_call.1} parent=5 // pred_check_branch
        %833 = sbr.rel (%p831) target = $region48
      $region47: #{tpu_custom_call.1} parent=5 // pred_region
        %s834 = ssub.s32 %s14, 2
        // Predicated region
        $region49: #{tpu_custom_call.1} parent=47 // pred_check
          %p835 = pneg %p169
        $region50: #{tpu_custom_call.1} parent=47 // pred_check_branch
          %837 = sbr.rel (%p835) target = $region52
        $region51: #{tpu_custom_call.1} parent=47 // pred_region
          %s838 = sand.u32 %s154, 1
          %s839 = scalar_lea.sflag [#allocation3], %s838
          %s840 = sand.u32 %s154, 1
          %s841 = smul.addr %s840, 64
          %s842 = scalar_lea.vmem [#allocation2], %s841
          %844 = dma.done %s839, 1024
        $region52: #{tpu_custom_call.1} parent=47 // pred_fallthru
          _
      $region48: #{tpu_custom_call.1} parent=5 // pred_fallthru
        _
    $region6: #{tpu_custom_call.1} parent=1 // loop_footer
      %s18 = sadd.s32 1, %s14
    $region7: #{tpu_custom_call.1} parent=1 // loop_footer_branch
      %13 = sbr.rel target = $region3
    $region8: #{tpu_custom_call.1} parent=1 // loop_exit
      _
    %845 = vsyncpa [#allocation3], 1
    %s846 = scalar_lea.sflag [#allocation3], 1
    %847 = vsyncpa %s846, 1

</llo_original>
